<compile_context>
chip_gen: v7x
topology: tpu7x:2x2x1
jax: 0.10.0
libtpu: 0.0.40
codegen_flags: <defaults>
</compile_context>

<pallas_src>
import functools

import jax
import jax.numpy as jnp
from jax import lax
from jax.experimental import pallas as pl
from jax.experimental.pallas import tpu as pltpu

INPUT_SIZE = 64
HIDDEN = 128
NUM_CLASSES = 2


def gru_kernel(x_ref, wih_ref, whh_ref, bi_ref, bhn_ref,   # inputs
               h_out_ref,                                    # output
               gi_ref,                                       # VMEM scratch (f32)
               *, seq_len, batch, unroll):
    """x_ref: (T*Bp, D) bf16 time-major; h_out_ref: (Bp, H) f32; gi_ref: (T*Bp, 3H) f32."""
    H = whh_ref.shape[0]

    # ---- time-parallel input projection: ONE bf16 MXU matmul over all steps ----
    # gi = x @ W_ih^T + (b_ih with b_hh folded into the r/z slices), f32 accum.
    gi_ref[...] = (
        jnp.dot(x_ref[...], wih_ref[...], preferred_element_type=jnp.float32)
        + bi_ref[...]
    )

    # Hoist the n-gate hidden-bias broadcast once (JAX doesn't CSE broadcast_in_dim).
    bhn_b = jnp.broadcast_to(bhn_ref[...], (batch, H))       # (Bp, H) f32, 1 vreg

    def step(t, h):
        start = pl.multiple_of(t * batch, batch)              # sublane-aligned
        gi = gi_ref[pl.ds(start, batch), :]                   # (Bp, 3H) f32
        # Re-read W_hh from VMEM every step (do NOT pin it in vregs across the
        # unrolled loop); h cast to bf16 only at the MXU input, carry stays f32.
        gh = jnp.dot(h.astype(jnp.bfloat16), whh_ref[...],
                     preferred_element_type=jnp.float32)      # (Bp, 3H) f32
        r = jax.nn.sigmoid(gi[:, 0 * H:1 * H] + gh[:, 0 * H:1 * H])
        z = jax.nn.sigmoid(gi[:, 1 * H:2 * H] + gh[:, 1 * H:2 * H])
        n = jnp.tanh(gi[:, 2 * H:3 * H] + r * (gh[:, 2 * H:3 * H] + bhn_b))
        return (1.0 - z) * n + z * h

    h0 = jnp.zeros((batch, H), jnp.float32)
    h_out_ref[...] = lax.fori_loop(0, seq_len, step, h0, unroll=unroll)


def gru_net_forward(x, params):
    """x: (B, 1, T, D) float32, mirroring the PyTorch module's input."""
    x = jnp.squeeze(x, axis=1)                                # (B, T, D)
    B, T, D = x.shape
    H = HIDDEN

    # Pad batch to the sublane granule (multiple of 8, min 8).
    Bp = max(8, ((B + 7) // 8) * 8)
    x_p = jnp.pad(x, ((0, Bp - B), (0, 0), (0, 0)))

    # Time-major and flattened: rows [t*Bp : (t+1)*Bp] are timestep t. bf16 MXU operand.
    x_flat = jnp.transpose(x_p, (1, 0, 2)).reshape(T * Bp, D).astype(jnp.bfloat16)

    wih_t = params["w_ih"].T.astype(jnp.bfloat16)             # (D, 3H) bf16
    whh_t = params["w_hh"].T.astype(jnp.bfloat16)             # (H, 3H) bf16
    # Fold b_ih + b_hh for the r/z gates; keep the n-gate hidden bias separate
    # (it must stay inside r * (...)). Biases stay f32.
    b_i = jnp.concatenate(
        [params["b_ih"][:2 * H] + params["b_hh"][:2 * H],
         params["b_ih"][2 * H:]]
    )[None, :]                                                # (1, 3H) f32
    b_hn = params["b_hh"][2 * H:][None, :]                    # (1, H) f32

    kernel = functools.partial(gru_kernel, seq_len=T, batch=Bp,
                               unroll=min(T, 8))
    vmem = pl.BlockSpec(memory_space=pltpu.MemorySpace.VMEM)

    # Explicit scoped-VMEM budget: inputs + output + gi scratch, with headroom.
    vmem_bytes = (
        x_flat.size * 2 + wih_t.size * 2 + whh_t.size * 2
        + b_i.size * 4 + b_hn.size * 4
        + Bp * H * 4                                          # output
        + T * Bp * 3 * H * 4                                  # gi scratch (f32)
    )
    vmem_limit = int(max(2 * vmem_bytes + (1 << 20), 4 << 20))

    h_last = pl.pallas_call(
        kernel,
        out_shape=jax.ShapeDtypeStruct((Bp, H), jnp.float32),
        in_specs=[vmem, vmem, vmem, vmem, vmem],
        out_specs=vmem,
        scratch_shapes=[pltpu.VMEM((T * Bp, 3 * H), jnp.float32)],
        compiler_params=pltpu.CompilerParams(vmem_limit_bytes=vmem_limit),
    )(x_flat, wih_t, whh_t, b_i, b_hn)

    # Tiny (B, 2) Linear stays in XLA (f32): keeps the kernel output lane-dense.
    return h_last[:B] @ params["w_fc"].T + params["b_fc"][None, :]


def reference_forward(x, params):
    """Pure-JAX f32 reference matching torch.nn.GRU (batch_first) + Linear."""
    x = jnp.squeeze(x, axis=1)
    B, T, D = x.shape
    H = HIDDEN
    h = jnp.zeros((B, H), jnp.float32)
    for t in range(T):
        xt = x[:, t, :]
        gi = xt @ params["w_ih"].T + params["b_ih"]
        gh = h @ params["w_hh"].T + params["b_hh"]
        r = jax.nn.sigmoid(gi[:, :H] + gh[:, :H])
        z = jax.nn.sigmoid(gi[:, H:2 * H] + gh[:, H:2 * H])
        n = jnp.tanh(gi[:, 2 * H:] + r * gh[:, 2 * H:])
        h = (1.0 - z) * n + z * h
    return h @ params["w_fc"].T + params["b_fc"]


def init_params(key):
    """Deterministic PyTorch-style uniform(-1/sqrt(H), 1/sqrt(H)) init."""
    H, D, C = HIDDEN, INPUT_SIZE, NUM_CLASSES
    ks = jax.random.split(key, 6)
    bound = 1.0 / jnp.sqrt(H)
    u = lambda k, shape: jax.random.uniform(k, shape, jnp.float32, -bound, bound)
    return {
        "w_ih": u(ks[0], (3 * H, D)),
        "w_hh": u(ks[1], (3 * H, H)),
        "b_ih": u(ks[2], (3 * H,)),
        "b_hh": u(ks[3], (3 * H,)),
        "w_fc": u(ks[4], (C, H)),
        "b_fc": u(ks[5], (C,)),
    }


if __name__ == "__main__":
    key = jax.random.PRNGKey(0)
    k_x, k_p = jax.random.split(key)

    B, T = 2, 8
    x = jax.random.normal(k_x, (B, 1, T, INPUT_SIZE), jnp.float32)
    params = init_params(k_p)

    out = gru_net_forward(x, params)
    out = jax.block_until_ready(out)

    ref = reference_forward(x, params)
    assert out.shape == (B, NUM_CLASSES), out.shape
    # bf16 MXU operands (f32 accumulation / f32 carry) -> relaxed tolerance.
    assert jnp.allclose(out, ref, atol=2e-2, rtol=2e-2), (out, ref)

    print("KERNEL_OK")
</pallas_src>

<mosaic_0001>
module attributes {stable_mosaic.version = 11 : i64} {
  func.func @gru_kernel(%arg0: memref<64x64xbf16, #tpu.memory_space<vmem>>, %arg1: memref<64x384xbf16, #tpu.memory_space<vmem>>, %arg2: memref<128x384xbf16, #tpu.memory_space<vmem>>, %arg3: memref<1x384xf32, #tpu.memory_space<vmem>>, %arg4: memref<1x128xf32, #tpu.memory_space<vmem>>, %arg5: memref<8x128xf32, #tpu.memory_space<vmem>>, %arg6: memref<64x384xf32, #tpu.memory_space<vmem>>) attributes {dimension_semantics = [], scalar_prefetch = 0 : i64, scratch_operands = 1 : i64, tpu.core_type = #tpu.core_type<tc>} {
    %c0 = arith.constant 0 : index
    %c0_0 = arith.constant 0 : index
    %0 = vector.load %arg0[%c0, %c0_0] : memref<64x64xbf16, #tpu.memory_space<vmem>>, vector<64x64xbf16>
    %c0_1 = arith.constant 0 : index
    %c0_2 = arith.constant 0 : index
    %1 = vector.load %arg1[%c0_1, %c0_2] : memref<64x384xbf16, #tpu.memory_space<vmem>>, vector<64x384xbf16>
    %cst = arith.constant dense<0.000000e+00> : vector<64x384xf32>
    %2 = tpu.matmul %0, %1, %cst {dimension_numbers = #tpu.dot_dimension_numbers<[1], [0], [0], [1], [0, 0, 1, 1], [], []>} : vector<64x64xbf16>, vector<64x384xbf16>, vector<64x384xf32> -> vector<64x384xf32>
    %c0_3 = arith.constant 0 : index
    %c0_4 = arith.constant 0 : index
    %3 = vector.load %arg3[%c0_3, %c0_4] : memref<1x384xf32, #tpu.memory_space<vmem>>, vector<1x384xf32>
    %4 = vector.broadcast %3 : vector<1x384xf32> to vector<64x384xf32>
    %5 = arith.addf %2, %4 : vector<64x384xf32>
    %c0_5 = arith.constant 0 : index
    %c0_6 = arith.constant 0 : index
    %6 = vector.load %arg6[%c0_5, %c0_6] : memref<64x384xf32, #tpu.memory_space<vmem>>, vector<64x384xf32>
    tpu.vector_store %arg6[%c0_5, %c0_6], %5 {strides = array<i32>} : memref<64x384xf32, #tpu.memory_space<vmem>>, vector<64x384xf32>,
    %c0_7 = arith.constant 0 : index
    %c0_8 = arith.constant 0 : index
    %7 = vector.load %arg4[%c0_7, %c0_8] : memref<1x128xf32, #tpu.memory_space<vmem>>, vector<1x128xf32>
    %8 = vector.shape_cast %7 : vector<1x128xf32> to vector<1x128xf32>
    %9 = vector.broadcast %8 : vector<1x128xf32> to vector<8x128xf32>
    %cst_9 = arith.constant 0.000000e+00 : f32
    %10 = vector.broadcast %cst_9 : f32 to vector<8x128xf32>
    %c0_i32 = arith.constant 0 : i32
    %c8_i32 = arith.constant 8 : i32
    %11 = arith.muli %c0_i32, %c8_i32 : i32
    %12 = tpu.assume_multiple %11, 8 : i32
    %13 = arith.index_cast %12 : i32 to index
    %c0_10 = arith.constant 0 : index
    %14 = vector.load %arg6[%13, %c0_10] : memref<64x384xf32, #tpu.memory_space<vmem>>, vector<8x384xf32>
    %15 = arith.truncf %10 : vector<8x128xf32> to vector<8x128xbf16>
    %c0_11 = arith.constant 0 : index
    %c0_12 = arith.constant 0 : index
    %16 = vector.load %arg2[%c0_11, %c0_12] : memref<128x384xbf16, #tpu.memory_space<vmem>>, vector<128x384xbf16>
    %cst_13 = arith.constant dense<0.000000e+00> : vector<8x384xf32>
    %17 = tpu.matmul %15, %16, %cst_13 {dimension_numbers = #tpu.dot_dimension_numbers<[1], [0], [0], [1], [0, 0, 1, 1], [], []>} : vector<8x128xbf16>, vector<128x384xbf16>, vector<8x384xf32> -> vector<8x384xf32>
    %18 = vector.extract_strided_slice %14 {offsets = [0, 0], sizes = [8, 128], strides = [1, 1]} : vector<8x384xf32> to vector<8x128xf32>
    %19 = vector.extract_strided_slice %17 {offsets = [0, 0], sizes = [8, 128], strides = [1, 1]} : vector<8x384xf32> to vector<8x128xf32>
    %20 = arith.addf %18, %19 : vector<8x128xf32>
    %21 = arith.negf %20 : vector<8x128xf32>
    %22 = math.exp %21 : vector<8x128xf32>
    %cst_14 = arith.constant 1.000000e+00 : f32
    %23 = vector.broadcast %cst_14 : f32 to vector<8x128xf32>
    %24 = arith.addf %23, %22 : vector<8x128xf32>
    %25 = arith.divf %23, %24 : vector<8x128xf32>
    %26 = vector.extract_strided_slice %14 {offsets = [0, 128], sizes = [8, 128], strides = [1, 1]} : vector<8x384xf32> to vector<8x128xf32>
    %27 = vector.extract_strided_slice %17 {offsets = [0, 128], sizes = [8, 128], strides = [1, 1]} : vector<8x384xf32> to vector<8x128xf32>
    %28 = arith.addf %26, %27 : vector<8x128xf32>
    %29 = arith.negf %28 : vector<8x128xf32>
    %30 = math.exp %29 : vector<8x128xf32>
    %cst_15 = arith.constant 1.000000e+00 : f32
    %31 = vector.broadcast %cst_15 : f32 to vector<8x128xf32>
    %32 = arith.addf %31, %30 : vector<8x128xf32>
    %33 = arith.divf %31, %32 : vector<8x128xf32>
    %34 = vector.extract_strided_slice %14 {offsets = [0, 256], sizes = [8, 128], strides = [1, 1]} : vector<8x384xf32> to vector<8x128xf32>
    %35 = vector.extract_strided_slice %17 {offsets = [0, 256], sizes = [8, 128], strides = [1, 1]} : vector<8x384xf32> to vector<8x128xf32>
    %36 = arith.addf %35, %9 : vector<8x128xf32>
    %37 = arith.mulf %25, %36 : vector<8x128xf32>
    %38 = arith.addf %34, %37 : vector<8x128xf32>
    %39 = math.tanh %38 : vector<8x128xf32>
    %cst_16 = arith.constant 1.000000e+00 : f32
    %40 = vector.broadcast %cst_16 : f32 to vector<8x128xf32>
    %41 = arith.subf %40, %33 : vector<8x128xf32>
    %42 = arith.mulf %41, %39 : vector<8x128xf32>
    %43 = arith.mulf %33, %10 : vector<8x128xf32>
    %44 = arith.addf %42, %43 : vector<8x128xf32>
    %c1_i32 = arith.constant 1 : i32
    %c8_i32_17 = arith.constant 8 : i32
    %45 = arith.muli %c1_i32, %c8_i32_17 : i32
    %46 = tpu.assume_multiple %45, 8 : i32
    %47 = arith.index_cast %46 : i32 to index
    %c0_18 = arith.constant 0 : index
    %48 = vector.load %arg6[%47, %c0_18] : memref<64x384xf32, #tpu.memory_space<vmem>>, vector<8x384xf32>
    %49 = arith.truncf %44 : vector<8x128xf32> to vector<8x128xbf16>
    %c0_19 = arith.constant 0 : index
    %c0_20 = arith.constant 0 : index
    %50 = vector.load %arg2[%c0_19, %c0_20] : memref<128x384xbf16, #tpu.memory_space<vmem>>, vector<128x384xbf16>
    %cst_21 = arith.constant dense<0.000000e+00> : vector<8x384xf32>
    %51 = tpu.matmul %49, %50, %cst_21 {dimension_numbers = #tpu.dot_dimension_numbers<[1], [0], [0], [1], [0, 0, 1, 1], [], []>} : vector<8x128xbf16>, vector<128x384xbf16>, vector<8x384xf32> -> vector<8x384xf32>
    %52 = vector.extract_strided_slice %48 {offsets = [0, 0], sizes = [8, 128], strides = [1, 1]} : vector<8x384xf32> to vector<8x128xf32>
    %53 = vector.extract_strided_slice %51 {offsets = [0, 0], sizes = [8, 128], strides = [1, 1]} : vector<8x384xf32> to vector<8x128xf32>
    %54 = arith.addf %52, %53 : vector<8x128xf32>
    %55 = arith.negf %54 : vector<8x128xf32>
    %56 = math.exp %55 : vector<8x128xf32>
    %cst_22 = arith.constant 1.000000e+00 : f32
    %57 = vector.broadcast %cst_22 : f32 to vector<8x128xf32>
    %58 = arith.addf %57, %56 : vector<8x128xf32>
    %59 = arith.divf %57, %58 : vector<8x128xf32>
    %60 = vector.extract_strided_slice %48 {offsets = [0, 128], sizes = [8, 128], strides = [1, 1]} : vector<8x384xf32> to vector<8x128xf32>
    %61 = vector.extract_strided_slice %51 {offsets = [0, 128], sizes = [8, 128], strides = [1, 1]} : vector<8x384xf32> to vector<8x128xf32>
    %62 = arith.addf %60, %61 : vector<8x128xf32>
    %63 = arith.negf %62 : vector<8x128xf32>
    %64 = math.exp %63 : vector<8x128xf32>
    %cst_23 = arith.constant 1.000000e+00 : f32
    %65 = vector.broadcast %cst_23 : f32 to vector<8x128xf32>
    %66 = arith.addf %65, %64 : vector<8x128xf32>
    %67 = arith.divf %65, %66 : vector<8x128xf32>
    %68 = vector.extract_strided_slice %48 {offsets = [0, 256], sizes = [8, 128], strides = [1, 1]} : vector<8x384xf32> to vector<8x128xf32>
    %69 = vector.extract_strided_slice %51 {offsets = [0, 256], sizes = [8, 128], strides = [1, 1]} : vector<8x384xf32> to vector<8x128xf32>
    %70 = arith.addf %69, %9 : vector<8x128xf32>
    %71 = arith.mulf %59, %70 : vector<8x128xf32>
    %72 = arith.addf %68, %71 : vector<8x128xf32>
    %73 = math.tanh %72 : vector<8x128xf32>
    %cst_24 = arith.constant 1.000000e+00 : f32
    %74 = vector.broadcast %cst_24 : f32 to vector<8x128xf32>
    %75 = arith.subf %74, %67 : vector<8x128xf32>
    %76 = arith.mulf %75, %73 : vector<8x128xf32>
    %77 = arith.mulf %67, %44 : vector<8x128xf32>
    %78 = arith.addf %76, %77 : vector<8x128xf32>
    %c2_i32 = arith.constant 2 : i32
    %c8_i32_25 = arith.constant 8 : i32
    %79 = arith.muli %c2_i32, %c8_i32_25 : i32
    %80 = tpu.assume_multiple %79, 8 : i32
    %81 = arith.index_cast %80 : i32 to index
    %c0_26 = arith.constant 0 : index
    %82 = vector.load %arg6[%81, %c0_26] : memref<64x384xf32, #tpu.memory_space<vmem>>, vector<8x384xf32>
    %83 = arith.truncf %78 : vector<8x128xf32> to vector<8x128xbf16>
    %c0_27 = arith.constant 0 : index
    %c0_28 = arith.constant 0 : index
    %84 = vector.load %arg2[%c0_27, %c0_28] : memref<128x384xbf16, #tpu.memory_space<vmem>>, vector<128x384xbf16>
    %cst_29 = arith.constant dense<0.000000e+00> : vector<8x384xf32>
    %85 = tpu.matmul %83, %84, %cst_29 {dimension_numbers = #tpu.dot_dimension_numbers<[1], [0], [0], [1], [0, 0, 1, 1], [], []>} : vector<8x128xbf16>, vector<128x384xbf16>, vector<8x384xf32> -> vector<8x384xf32>
    %86 = vector.extract_strided_slice %82 {offsets = [0, 0], sizes = [8, 128], strides = [1, 1]} : vector<8x384xf32> to vector<8x128xf32>
    %87 = vector.extract_strided_slice %85 {offsets = [0, 0], sizes = [8, 128], strides = [1, 1]} : vector<8x384xf32> to vector<8x128xf32>
    %88 = arith.addf %86, %87 : vector<8x128xf32>
    %89 = arith.negf %88 : vector<8x128xf32>
    %90 = math.exp %89 : vector<8x128xf32>
    %cst_30 = arith.constant 1.000000e+00 : f32
    %91 = vector.broadcast %cst_30 : f32 to vector<8x128xf32>
    %92 = arith.addf %91, %90 : vector<8x128xf32>
    %93 = arith.divf %91, %92 : vector<8x128xf32>
    %94 = vector.extract_strided_slice %82 {offsets = [0, 128], sizes = [8, 128], strides = [1, 1]} : vector<8x384xf32> to vector<8x128xf32>
    %95 = vector.extract_strided_slice %85 {offsets = [0, 128], sizes = [8, 128], strides = [1, 1]} : vector<8x384xf32> to vector<8x128xf32>
    %96 = arith.addf %94, %95 : vector<8x128xf32>
    %97 = arith.negf %96 : vector<8x128xf32>
    %98 = math.exp %97 : vector<8x128xf32>
    %cst_31 = arith.constant 1.000000e+00 : f32
    %99 = vector.broadcast %cst_31 : f32 to vector<8x128xf32>
    %100 = arith.addf %99, %98 : vector<8x128xf32>
    %101 = arith.divf %99, %100 : vector<8x128xf32>
    %102 = vector.extract_strided_slice %82 {offsets = [0, 256], sizes = [8, 128], strides = [1, 1]} : vector<8x384xf32> to vector<8x128xf32>
    %103 = vector.extract_strided_slice %85 {offsets = [0, 256], sizes = [8, 128], strides = [1, 1]} : vector<8x384xf32> to vector<8x128xf32>
    %104 = arith.addf %103, %9 : vector<8x128xf32>
    %105 = arith.mulf %93, %104 : vector<8x128xf32>
    %106 = arith.addf %102, %105 : vector<8x128xf32>
    %107 = math.tanh %106 : vector<8x128xf32>
    %cst_32 = arith.constant 1.000000e+00 : f32
    %108 = vector.broadcast %cst_32 : f32 to vector<8x128xf32>
    %109 = arith.subf %108, %101 : vector<8x128xf32>
    %110 = arith.mulf %109, %107 : vector<8x128xf32>
    %111 = arith.mulf %101, %78 : vector<8x128xf32>
    %112 = arith.addf %110, %111 : vector<8x128xf32>
    %c3_i32 = arith.constant 3 : i32
    %c8_i32_33 = arith.constant 8 : i32
    %113 = arith.muli %c3_i32, %c8_i32_33 : i32
    %114 = tpu.assume_multiple %113, 8 : i32
    %115 = arith.index_cast %114 : i32 to index
    %c0_34 = arith.constant 0 : index
    %116 = vector.load %arg6[%115, %c0_34] : memref<64x384xf32, #tpu.memory_space<vmem>>, vector<8x384xf32>
    %117 = arith.truncf %112 : vector<8x128xf32> to vector<8x128xbf16>
    %c0_35 = arith.constant 0 : index
    %c0_36 = arith.constant 0 : index
    %118 = vector.load %arg2[%c0_35, %c0_36] : memref<128x384xbf16, #tpu.memory_space<vmem>>, vector<128x384xbf16>
    %cst_37 = arith.constant dense<0.000000e+00> : vector<8x384xf32>
    %119 = tpu.matmul %117, %118, %cst_37 {dimension_numbers = #tpu.dot_dimension_numbers<[1], [0], [0], [1], [0, 0, 1, 1], [], []>} : vector<8x128xbf16>, vector<128x384xbf16>, vector<8x384xf32> -> vector<8x384xf32>
    %120 = vector.extract_strided_slice %116 {offsets = [0, 0], sizes = [8, 128], strides = [1, 1]} : vector<8x384xf32> to vector<8x128xf32>
    %121 = vector.extract_strided_slice %119 {offsets = [0, 0], sizes = [8, 128], strides = [1, 1]} : vector<8x384xf32> to vector<8x128xf32>
    %122 = arith.addf %120, %121 : vector<8x128xf32>
    %123 = arith.negf %122 : vector<8x128xf32>
    %124 = math.exp %123 : vector<8x128xf32>
    %cst_38 = arith.constant 1.000000e+00 : f32
    %125 = vector.broadcast %cst_38 : f32 to vector<8x128xf32>
    %126 = arith.addf %125, %124 : vector<8x128xf32>
    %127 = arith.divf %125, %126 : vector<8x128xf32>
    %128 = vector.extract_strided_slice %116 {offsets = [0, 128], sizes = [8, 128], strides = [1, 1]} : vector<8x384xf32> to vector<8x128xf32>
    %129 = vector.extract_strided_slice %119 {offsets = [0, 128], sizes = [8, 128], strides = [1, 1]} : vector<8x384xf32> to vector<8x128xf32>
    %130 = arith.addf %128, %129 : vector<8x128xf32>
    %131 = arith.negf %130 : vector<8x128xf32>
    %132 = math.exp %131 : vector<8x128xf32>
    %cst_39 = arith.constant 1.000000e+00 : f32
    %133 = vector.broadcast %cst_39 : f32 to vector<8x128xf32>
    %134 = arith.addf %133, %132 : vector<8x128xf32>
    %135 = arith.divf %133, %134 : vector<8x128xf32>
    %136 = vector.extract_strided_slice %116 {offsets = [0, 256], sizes = [8, 128], strides = [1, 1]} : vector<8x384xf32> to vector<8x128xf32>
    %137 = vector.extract_strided_slice %119 {offsets = [0, 256], sizes = [8, 128], strides = [1, 1]} : vector<8x384xf32> to vector<8x128xf32>
    %138 = arith.addf %137, %9 : vector<8x128xf32>
    %139 = arith.mulf %127, %138 : vector<8x128xf32>
    %140 = arith.addf %136, %139 : vector<8x128xf32>
    %141 = math.tanh %140 : vector<8x128xf32>
    %cst_40 = arith.constant 1.000000e+00 : f32
    %142 = vector.broadcast %cst_40 : f32 to vector<8x128xf32>
    %143 = arith.subf %142, %135 : vector<8x128xf32>
    %144 = arith.mulf %143, %141 : vector<8x128xf32>
    %145 = arith.mulf %135, %112 : vector<8x128xf32>
    %146 = arith.addf %144, %145 : vector<8x128xf32>
    %c4_i32 = arith.constant 4 : i32
    %c8_i32_41 = arith.constant 8 : i32
    %147 = arith.muli %c4_i32, %c8_i32_41 : i32
    %148 = tpu.assume_multiple %147, 8 : i32
    %149 = arith.index_cast %148 : i32 to index
    %c0_42 = arith.constant 0 : index
    %150 = vector.load %arg6[%149, %c0_42] : memref<64x384xf32, #tpu.memory_space<vmem>>, vector<8x384xf32>
    %151 = arith.truncf %146 : vector<8x128xf32> to vector<8x128xbf16>
    %c0_43 = arith.constant 0 : index
    %c0_44 = arith.constant 0 : index
    %152 = vector.load %arg2[%c0_43, %c0_44] : memref<128x384xbf16, #tpu.memory_space<vmem>>, vector<128x384xbf16>
    %cst_45 = arith.constant dense<0.000000e+00> : vector<8x384xf32>
    %153 = tpu.matmul %151, %152, %cst_45 {dimension_numbers = #tpu.dot_dimension_numbers<[1], [0], [0], [1], [0, 0, 1, 1], [], []>} : vector<8x128xbf16>, vector<128x384xbf16>, vector<8x384xf32> -> vector<8x384xf32>
    %154 = vector.extract_strided_slice %150 {offsets = [0, 0], sizes = [8, 128], strides = [1, 1]} : vector<8x384xf32> to vector<8x128xf32>
    %155 = vector.extract_strided_slice %153 {offsets = [0, 0], sizes = [8, 128], strides = [1, 1]} : vector<8x384xf32> to vector<8x128xf32>
    %156 = arith.addf %154, %155 : vector<8x128xf32>
    %157 = arith.negf %156 : vector<8x128xf32>
    %158 = math.exp %157 : vector<8x128xf32>
    %cst_46 = arith.constant 1.000000e+00 : f32
    %159 = vector.broadcast %cst_46 : f32 to vector<8x128xf32>
    %160 = arith.addf %159, %158 : vector<8x128xf32>
    %161 = arith.divf %159, %160 : vector<8x128xf32>
    %162 = vector.extract_strided_slice %150 {offsets = [0, 128], sizes = [8, 128], strides = [1, 1]} : vector<8x384xf32> to vector<8x128xf32>
    %163 = vector.extract_strided_slice %153 {offsets = [0, 128], sizes = [8, 128], strides = [1, 1]} : vector<8x384xf32> to vector<8x128xf32>
    %164 = arith.addf %162, %163 : vector<8x128xf32>
    %165 = arith.negf %164 : vector<8x128xf32>
    %166 = math.exp %165 : vector<8x128xf32>
    %cst_47 = arith.constant 1.000000e+00 : f32
    %167 = vector.broadcast %cst_47 : f32 to vector<8x128xf32>
    %168 = arith.addf %167, %166 : vector<8x128xf32>
    %169 = arith.divf %167, %168 : vector<8x128xf32>
    %170 = vector.extract_strided_slice %150 {offsets = [0, 256], sizes = [8, 128], strides = [1, 1]} : vector<8x384xf32> to vector<8x128xf32>
    %171 = vector.extract_strided_slice %153 {offsets = [0, 256], sizes = [8, 128], strides = [1, 1]} : vector<8x384xf32> to vector<8x128xf32>
    %172 = arith.addf %171, %9 : vector<8x128xf32>
    %173 = arith.mulf %161, %172 : vector<8x128xf32>
    %174 = arith.addf %170, %173 : vector<8x128xf32>
    %175 = math.tanh %174 : vector<8x128xf32>
    %cst_48 = arith.constant 1.000000e+00 : f32
    %176 = vector.broadcast %cst_48 : f32 to vector<8x128xf32>
    %177 = arith.subf %176, %169 : vector<8x128xf32>
    %178 = arith.mulf %177, %175 : vector<8x128xf32>
    %179 = arith.mulf %169, %146 : vector<8x128xf32>
    %180 = arith.addf %178, %179 : vector<8x128xf32>
    %c5_i32 = arith.constant 5 : i32
    %c8_i32_49 = arith.constant 8 : i32
    %181 = arith.muli %c5_i32, %c8_i32_49 : i32
    %182 = tpu.assume_multiple %181, 8 : i32
    %183 = arith.index_cast %182 : i32 to index
    %c0_50 = arith.constant 0 : index
    %184 = vector.load %arg6[%183, %c0_50] : memref<64x384xf32, #tpu.memory_space<vmem>>, vector<8x384xf32>
    %185 = arith.truncf %180 : vector<8x128xf32> to vector<8x128xbf16>
    %c0_51 = arith.constant 0 : index
    %c0_52 = arith.constant 0 : index
    %186 = vector.load %arg2[%c0_51, %c0_52] : memref<128x384xbf16, #tpu.memory_space<vmem>>, vector<128x384xbf16>
    %cst_53 = arith.constant dense<0.000000e+00> : vector<8x384xf32>
    %187 = tpu.matmul %185, %186, %cst_53 {dimension_numbers = #tpu.dot_dimension_numbers<[1], [0], [0], [1], [0, 0, 1, 1], [], []>} : vector<8x128xbf16>, vector<128x384xbf16>, vector<8x384xf32> -> vector<8x384xf32>
    %188 = vector.extract_strided_slice %184 {offsets = [0, 0], sizes = [8, 128], strides = [1, 1]} : vector<8x384xf32> to vector<8x128xf32>
    %189 = vector.extract_strided_slice %187 {offsets = [0, 0], sizes = [8, 128], strides = [1, 1]} : vector<8x384xf32> to vector<8x128xf32>
    %190 = arith.addf %188, %189 : vector<8x128xf32>
    %191 = arith.negf %190 : vector<8x128xf32>
    %192 = math.exp %191 : vector<8x128xf32>
    %cst_54 = arith.constant 1.000000e+00 : f32
    %193 = vector.broadcast %cst_54 : f32 to vector<8x128xf32>
    %194 = arith.addf %193, %192 : vector<8x128xf32>
    %195 = arith.divf %193, %194 : vector<8x128xf32>
    %196 = vector.extract_strided_slice %184 {offsets = [0, 128], sizes = [8, 128], strides = [1, 1]} : vector<8x384xf32> to vector<8x128xf32>
    %197 = vector.extract_strided_slice %187 {offsets = [0, 128], sizes = [8, 128], strides = [1, 1]} : vector<8x384xf32> to vector<8x128xf32>
    %198 = arith.addf %196, %197 : vector<8x128xf32>
    %199 = arith.negf %198 : vector<8x128xf32>
    %200 = math.exp %199 : vector<8x128xf32>
    %cst_55 = arith.constant 1.000000e+00 : f32
    %201 = vector.broadcast %cst_55 : f32 to vector<8x128xf32>
    %202 = arith.addf %201, %200 : vector<8x128xf32>
    %203 = arith.divf %201, %202 : vector<8x128xf32>
    %204 = vector.extract_strided_slice %184 {offsets = [0, 256], sizes = [8, 128], strides = [1, 1]} : vector<8x384xf32> to vector<8x128xf32>
    %205 = vector.extract_strided_slice %187 {offsets = [0, 256], sizes = [8, 128], strides = [1, 1]} : vector<8x384xf32> to vector<8x128xf32>
    %206 = arith.addf %205, %9 : vector<8x128xf32>
    %207 = arith.mulf %195, %206 : vector<8x128xf32>
    %208 = arith.addf %204, %207 : vector<8x128xf32>
    %209 = math.tanh %208 : vector<8x128xf32>
    %cst_56 = arith.constant 1.000000e+00 : f32
    %210 = vector.broadcast %cst_56 : f32 to vector<8x128xf32>
    %211 = arith.subf %210, %203 : vector<8x128xf32>
    %212 = arith.mulf %211, %209 : vector<8x128xf32>
    %213 = arith.mulf %203, %180 : vector<8x128xf32>
    %214 = arith.addf %212, %213 : vector<8x128xf32>
    %c6_i32 = arith.constant 6 : i32
    %c8_i32_57 = arith.constant 8 : i32
    %215 = arith.muli %c6_i32, %c8_i32_57 : i32
    %216 = tpu.assume_multiple %215, 8 : i32
    %217 = arith.index_cast %216 : i32 to index
    %c0_58 = arith.constant 0 : index
    %218 = vector.load %arg6[%217, %c0_58] : memref<64x384xf32, #tpu.memory_space<vmem>>, vector<8x384xf32>
    %219 = arith.truncf %214 : vector<8x128xf32> to vector<8x128xbf16>
    %c0_59 = arith.constant 0 : index
    %c0_60 = arith.constant 0 : index
    %220 = vector.load %arg2[%c0_59, %c0_60] : memref<128x384xbf16, #tpu.memory_space<vmem>>, vector<128x384xbf16>
    %cst_61 = arith.constant dense<0.000000e+00> : vector<8x384xf32>
    %221 = tpu.matmul %219, %220, %cst_61 {dimension_numbers = #tpu.dot_dimension_numbers<[1], [0], [0], [1], [0, 0, 1, 1], [], []>} : vector<8x128xbf16>, vector<128x384xbf16>, vector<8x384xf32> -> vector<8x384xf32>
    %222 = vector.extract_strided_slice %218 {offsets = [0, 0], sizes = [8, 128], strides = [1, 1]} : vector<8x384xf32> to vector<8x128xf32>
    %223 = vector.extract_strided_slice %221 {offsets = [0, 0], sizes = [8, 128], strides = [1, 1]} : vector<8x384xf32> to vector<8x128xf32>
    %224 = arith.addf %222, %223 : vector<8x128xf32>
    %225 = arith.negf %224 : vector<8x128xf32>
    %226 = math.exp %225 : vector<8x128xf32>
    %cst_62 = arith.constant 1.000000e+00 : f32
    %227 = vector.broadcast %cst_62 : f32 to vector<8x128xf32>
    %228 = arith.addf %227, %226 : vector<8x128xf32>
    %229 = arith.divf %227, %228 : vector<8x128xf32>
    %230 = vector.extract_strided_slice %218 {offsets = [0, 128], sizes = [8, 128], strides = [1, 1]} : vector<8x384xf32> to vector<8x128xf32>
    %231 = vector.extract_strided_slice %221 {offsets = [0, 128], sizes = [8, 128], strides = [1, 1]} : vector<8x384xf32> to vector<8x128xf32>
    %232 = arith.addf %230, %231 : vector<8x128xf32>
    %233 = arith.negf %232 : vector<8x128xf32>
    %234 = math.exp %233 : vector<8x128xf32>
    %cst_63 = arith.constant 1.000000e+00 : f32
    %235 = vector.broadcast %cst_63 : f32 to vector<8x128xf32>
    %236 = arith.addf %235, %234 : vector<8x128xf32>
    %237 = arith.divf %235, %236 : vector<8x128xf32>
    %238 = vector.extract_strided_slice %218 {offsets = [0, 256], sizes = [8, 128], strides = [1, 1]} : vector<8x384xf32> to vector<8x128xf32>
    %239 = vector.extract_strided_slice %221 {offsets = [0, 256], sizes = [8, 128], strides = [1, 1]} : vector<8x384xf32> to vector<8x128xf32>
    %240 = arith.addf %239, %9 : vector<8x128xf32>
    %241 = arith.mulf %229, %240 : vector<8x128xf32>
    %242 = arith.addf %238, %241 : vector<8x128xf32>
    %243 = math.tanh %242 : vector<8x128xf32>
    %cst_64 = arith.constant 1.000000e+00 : f32
    %244 = vector.broadcast %cst_64 : f32 to vector<8x128xf32>
    %245 = arith.subf %244, %237 : vector<8x128xf32>
    %246 = arith.mulf %245, %243 : vector<8x128xf32>
    %247 = arith.mulf %237, %214 : vector<8x128xf32>
    %248 = arith.addf %246, %247 : vector<8x128xf32>
    %c7_i32 = arith.constant 7 : i32
    %c8_i32_65 = arith.constant 8 : i32
    %249 = arith.muli %c7_i32, %c8_i32_65 : i32
    %250 = tpu.assume_multiple %249, 8 : i32
    %251 = arith.index_cast %250 : i32 to index
    %c0_66 = arith.constant 0 : index
    %252 = vector.load %arg6[%251, %c0_66] : memref<64x384xf32, #tpu.memory_space<vmem>>, vector<8x384xf32>
    %253 = arith.truncf %248 : vector<8x128xf32> to vector<8x128xbf16>
    %c0_67 = arith.constant 0 : index
    %c0_68 = arith.constant 0 : index
    %254 = vector.load %arg2[%c0_67, %c0_68] : memref<128x384xbf16, #tpu.memory_space<vmem>>, vector<128x384xbf16>
    %cst_69 = arith.constant dense<0.000000e+00> : vector<8x384xf32>
    %255 = tpu.matmul %253, %254, %cst_69 {dimension_numbers = #tpu.dot_dimension_numbers<[1], [0], [0], [1], [0, 0, 1, 1], [], []>} : vector<8x128xbf16>, vector<128x384xbf16>, vector<8x384xf32> -> vector<8x384xf32>
    %256 = vector.extract_strided_slice %252 {offsets = [0, 0], sizes = [8, 128], strides = [1, 1]} : vector<8x384xf32> to vector<8x128xf32>
    %257 = vector.extract_strided_slice %255 {offsets = [0, 0], sizes = [8, 128], strides = [1, 1]} : vector<8x384xf32> to vector<8x128xf32>
    %258 = arith.addf %256, %257 : vector<8x128xf32>
    %259 = arith.negf %258 : vector<8x128xf32>
    %260 = math.exp %259 : vector<8x128xf32>
    %cst_70 = arith.constant 1.000000e+00 : f32
    %261 = vector.broadcast %cst_70 : f32 to vector<8x128xf32>
    %262 = arith.addf %261, %260 : vector<8x128xf32>
    %263 = arith.divf %261, %262 : vector<8x128xf32>
    %264 = vector.extract_strided_slice %252 {offsets = [0, 128], sizes = [8, 128], strides = [1, 1]} : vector<8x384xf32> to vector<8x128xf32>
    %265 = vector.extract_strided_slice %255 {offsets = [0, 128], sizes = [8, 128], strides = [1, 1]} : vector<8x384xf32> to vector<8x128xf32>
    %266 = arith.addf %264, %265 : vector<8x128xf32>
    %267 = arith.negf %266 : vector<8x128xf32>
    %268 = math.exp %267 : vector<8x128xf32>
    %cst_71 = arith.constant 1.000000e+00 : f32
    %269 = vector.broadcast %cst_71 : f32 to vector<8x128xf32>
    %270 = arith.addf %269, %268 : vector<8x128xf32>
    %271 = arith.divf %269, %270 : vector<8x128xf32>
    %272 = vector.extract_strided_slice %252 {offsets = [0, 256], sizes = [8, 128], strides = [1, 1]} : vector<8x384xf32> to vector<8x128xf32>
    %273 = vector.extract_strided_slice %255 {offsets = [0, 256], sizes = [8, 128], strides = [1, 1]} : vector<8x384xf32> to vector<8x128xf32>
    %274 = arith.addf %273, %9 : vector<8x128xf32>
    %275 = arith.mulf %263, %274 : vector<8x128xf32>
    %276 = arith.addf %272, %275 : vector<8x128xf32>
    %277 = math.tanh %276 : vector<8x128xf32>
    %cst_72 = arith.constant 1.000000e+00 : f32
    %278 = vector.broadcast %cst_72 : f32 to vector<8x128xf32>
    %279 = arith.subf %278, %271 : vector<8x128xf32>
    %280 = arith.mulf %279, %277 : vector<8x128xf32>
    %281 = arith.mulf %271, %248 : vector<8x128xf32>
    %282 = arith.addf %280, %281 : vector<8x128xf32>
    %c8_i32_73 = arith.constant 8 : i32
    %c0_74 = arith.constant 0 : index
    %c0_75 = arith.constant 0 : index
    %283 = vector.load %arg5[%c0_74, %c0_75] : memref<8x128xf32, #tpu.memory_space<vmem>>, vector<8x128xf32>
    tpu.vector_store %arg5[%c0_74, %c0_75], %282 {strides = array<i32>} : memref<8x128xf32, #tpu.memory_space<vmem>>, vector<8x128xf32>,
    return
  }
}

</mosaic_0001>

<llo_original>
// kernel: tpu_custom_call.1
$region0: #{tpu_custom_call.1}
  #allocation0 [shape = 'u32[]', space=smem, size = 0x4, offset = 0x4, fixed_abs, tag = 'smem constant byte address 0x4 - core index']
  #allocation1 [shape = 'u32[144,128]{1,0:T(1,128)}', space=vmem, size = 0x12000, scoped, tag = 'internal scratch']
  #allocation2 [shape = 'f32[64,384]{1,0:T(8,128)}', space=vmem, size = 0x18000, scoped, tag = 'scratch operand']
  %s0 = inlined_call_operand.hbm [shape: bf16[64,64], index: 0, kind: input, shape index: {}]
  %s1 = inlined_call_operand.hbm [shape: bf16[64,384], index: 1, kind: input, shape index: {}]
  %s2 = inlined_call_operand.hbm [shape: bf16[128,384], index: 2, kind: input, shape index: {}]
  %s3 = inlined_call_operand.vmem [shape: f32[1,384], index: 3, kind: input, shape index: {}]
  %s4 = inlined_call_operand.vmem [shape: f32[1,128], index: 4, kind: input, shape index: {}]
  %s5 = inlined_call_operand.hbm [shape: f32[8,128], index: 5, kind: output, shape index: {}]
  %s6 = sld [smem:[#allocation0]]
  $region42: #{tpu_custom_call.1} parent=0
    _
  %s8 = ssub.s32 1, %s6
  %s9 = scalar_select 0, %s8, %s6
  $region1: #{tpu_custom_call.1} parent=0
    #allocation3 [shape = 'u8[16384]{0}', space=vmem, size = 0x4000, scoped, tag = 'input window, operand 0, single buffered']
    #allocation4 [shape = 's32[1]{0}', space=sflag, size = 0x4, scoped, tag = 'scoped memory for tpu_custom_call.1']
    #allocation5 [shape = 's32[1]{0}', space=sflag, size = 0x4, scoped, tag = 'scoped memory for tpu_custom_call.1']
    #allocation6 [shape = 'u8[49152]{0}', space=vmem, size = 0xc000, scoped, tag = 'input window, operand 1, single buffered']
    #allocation7 [shape = 's32[1]{0}', space=sflag, size = 0x4, scoped, tag = 'scoped memory for tpu_custom_call.1']
    #allocation8 [shape = 'u8[98304]{0}', space=vmem, size = 0x18000, scoped, tag = 'input window, operand 2, single buffered']
    #allocation9 [shape = 'u8[4096]{0}', space=vmem, size = 0x1000, scoped, tag = 'output window, operand 0, single buffered']
    %10 = vsyncpa [#allocation4], 0
    %11 = vsyncpa [#allocation7], 0
    %12 = vsyncpa [#allocation5], 0
    // Predicated region
    $region2: #{tpu_custom_call.1} parent=1 // pred_check
      _
    $region3: #{tpu_custom_call.1} parent=1 // pred_check_branch
      %14 = sbr.rel (0) target = $region5
    $region4: #{tpu_custom_call.1} parent=1 // pred_region
      %s16 = ssub.s32 512, 512
      %17 = vsyncadd [#allocation4], %s16
      %s18 = sshll.u32 [#allocation3], 4
      %s19 = int_to_ptr.vmem [resolvable:$true] %s18
      %24 = dma.hbm_to_vmem [thread:$0]  %s0, 512, %s19, [#allocation4], 64, 64, 4
    $region5: #{tpu_custom_call.1} parent=1 // pred_fallthru
      _
    // Predicated region
    $region6: #{tpu_custom_call.1} parent=1 // pred_check
      _
    $region7: #{tpu_custom_call.1} parent=1 // pred_check_branch
      %26 = sbr.rel (0) target = $region9
    $region8: #{tpu_custom_call.1} parent=1 // pred_region
      %s28 = ssub.s32 1536, 1536
      %29 = vsyncadd [#allocation7], %s28
      %s30 = sshll.u32 [#allocation6], 4
      %s31 = int_to_ptr.vmem [resolvable:$true] %s30
      %36 = dma.hbm_to_vmem [thread:$0]  %s1, 1536, %s31, [#allocation7], 192, 192, 12
    $region9: #{tpu_custom_call.1} parent=1 // pred_fallthru
      _
    // Predicated region
    $region10: #{tpu_custom_call.1} parent=1 // pred_check
      _
    $region11: #{tpu_custom_call.1} parent=1 // pred_check_branch
      %38 = sbr.rel (0) target = $region13
    $region12: #{tpu_custom_call.1} parent=1 // pred_region
      %s40 = ssub.s32 3072, 3072
      %41 = vsyncadd [#allocation7], %s40
      %s42 = sshll.u32 [#allocation8], 4
      %s43 = int_to_ptr.vmem [resolvable:$true] %s42
      %48 = dma.hbm_to_vmem [thread:$0]  %s2, 3072, %s43, [#allocation7], 192, 192, 12
    $region13: #{tpu_custom_call.1} parent=1 // pred_fallthru
      _
    // Predicated region
    $region14: #{tpu_custom_call.1} parent=1 // pred_check
      _
    $region15: #{tpu_custom_call.1} parent=1 // pred_check_branch
      %50 = sbr.rel (0) target = $region17
    $region16: #{tpu_custom_call.1} parent=1 // pred_region
      _
    $region17: #{tpu_custom_call.1} parent=1 // pred_fallthru
      _
    // Predicated region
    $region18: #{tpu_custom_call.1} parent=1 // pred_check
      _
    $region19: #{tpu_custom_call.1} parent=1 // pred_check_branch
      %52 = sbr.rel (0) target = $region21
    $region20: #{tpu_custom_call.1} parent=1 // pred_region
      _
    $region21: #{tpu_custom_call.1} parent=1 // pred_fallthru
      _
    // Predicated region
    $region22: #{tpu_custom_call.1} parent=1 // pred_check
      _
    $region23: #{tpu_custom_call.1} parent=1 // pred_check_branch
      %54 = sbr.rel (0) target = $region25
    $region24: #{tpu_custom_call.1} parent=1 // pred_region
      %55 = dma.done [#allocation4], 512
    $region25: #{tpu_custom_call.1} parent=1 // pred_fallthru
      _
    // Predicated region
    $region26: #{tpu_custom_call.1} parent=1 // pred_check
      _
    $region27: #{tpu_custom_call.1} parent=1 // pred_check_branch
      %57 = sbr.rel (0) target = $region29
    $region28: #{tpu_custom_call.1} parent=1 // pred_region
      %58 = dma.done [#allocation7], 1536
    $region29: #{tpu_custom_call.1} parent=1 // pred_fallthru
      _
    // Predicated region
    $region30: #{tpu_custom_call.1} parent=1 // pred_check
      _
    $region31: #{tpu_custom_call.1} parent=1 // pred_check_branch
      %60 = sbr.rel (0) target = $region33
    $region32: #{tpu_custom_call.1} parent=1 // pred_region
      %61 = dma.done [#allocation7], 3072
    $region33: #{tpu_custom_call.1} parent=1 // pred_fallthru
      _
    %v63 = vld [vmem:[#allocation3] sm:$0xf]
    %v64 = vld [vmem:[#allocation3 + $0x4] sm:$0xf]
    %v65 = vld [vmem:[#allocation3 + $0x8] sm:$0xf]
    %v66 = vld [vmem:[#allocation3 + $0xc] sm:$0xf]
    %v67 = vld [vmem:[#allocation3 + $0x10] sm:$0xf]
    %v68 = vld [vmem:[#allocation3 + $0x14] sm:$0xf]
    %v69 = vld [vmem:[#allocation3 + $0x18] sm:$0xf]
    %v70 = vld [vmem:[#allocation3 + $0x1c] sm:$0xf]
    %v71 = vld [vmem:[#allocation6] sm:$0xff]
    %v72 = vld [vmem:[#allocation6 + $0x8] sm:$0xf]
    %v73 = vld [vmem:[#allocation6 + $0xc] sm:$0xff]
    %v74 = vld [vmem:[#allocation6 + $0x14] sm:$0xf]
    %v75 = vld [vmem:[#allocation6 + $0x18] sm:$0xff]
    %v76 = vld [vmem:[#allocation6 + $0x20] sm:$0xf]
    %v77 = vld [vmem:[#allocation6 + $0x24] sm:$0xff]
    %v78 = vld [vmem:[#allocation6 + $0x2c] sm:$0xf]
    %v79 = vld [vmem:[#allocation6 + $0x30] sm:$0xff]
    %v80 = vld [vmem:[#allocation6 + $0x38] sm:$0xf]
    %v81 = vld [vmem:[#allocation6 + $0x3c] sm:$0xff]
    %v82 = vld [vmem:[#allocation6 + $0x44] sm:$0xf]
    %v83 = vld [vmem:[#allocation6 + $0x48] sm:$0xff]
    %v84 = vld [vmem:[#allocation6 + $0x50] sm:$0xf]
    %v85 = vld [vmem:[#allocation6 + $0x54] sm:$0xff]
    %v86 = vld [vmem:[#allocation6 + $0x5c] sm:$0xf]
    %v87 = vld [vmem:[%s3] sm:$0x7]
    %v89 = vlaneseq
    %v90 = vshrl.u32 %v89, 7
    %v91 = vsub.s32 0, %v90
    %v92 = vrot.slane %v87, %v91
    %v93 = vlaneseq
    %v94 = vshrl.u32 %v93, 7
    %v95 = vsub.s32 1, %v94
    %v96 = vrot.slane %v87, %v95
    %v97 = vlaneseq
    %v98 = vshrl.u32 %v97, 7
    %v99 = vsub.s32 2, %v98
    %v100 = vrot.slane %v87, %v99
    %v112 = vunpack.c.l.b16 %v63
    %v113 = vunpack.c.l.b16 %v64
    %v114 = vunpack.c.l.b16 %v65
    %v115 = vunpack.c.l.b16 %v66
    %v116 = vunpack.c.l.b16 %v67
    %v117 = vunpack.c.l.b16 %v68
    %v118 = vunpack.c.l.b16 %v69
    %v119 = vunpack.c.l.b16 %v70
    %v120 = vpack.c.b16 %v113, %v112
    %v121 = vpack.c.b16 %v115, %v114
    %v122 = vpack.c.b16 %v117, %v116
    %v123 = vpack.c.b16 %v119, %v118
    %v140 = vunpack.c.l.b16 %v71
    %v141 = vunpack.c.h.b16 %v71
    %v142 = vunpack.c.l.b16 %v72
    %v143 = vunpack.c.l.b16 %v73
    %v144 = vunpack.c.h.b16 %v73
    %v145 = vunpack.c.l.b16 %v74
    %v146 = vunpack.c.l.b16 %v75
    %v147 = vunpack.c.h.b16 %v75
    %v148 = vunpack.c.l.b16 %v76
    %v149 = vunpack.c.l.b16 %v77
    %v150 = vunpack.c.h.b16 %v77
    %v151 = vunpack.c.l.b16 %v78
    %v152 = vunpack.c.l.b16 %v79
    %v153 = vunpack.c.h.b16 %v79
    %v154 = vunpack.c.l.b16 %v80
    %v155 = vunpack.c.l.b16 %v81
    %v156 = vunpack.c.h.b16 %v81
    %v157 = vunpack.c.l.b16 %v82
    %v158 = vunpack.c.l.b16 %v83
    %v159 = vunpack.c.h.b16 %v83
    %v160 = vunpack.c.l.b16 %v84
    %v161 = vunpack.c.l.b16 %v85
    %v162 = vunpack.c.h.b16 %v85
    %v163 = vunpack.c.l.b16 %v86
    %v164 = vpack.c.b16 %v143, %v140
    %v165 = vpack.c.b16 %v144, %v141
    %v166 = vpack.c.b16 %v145, %v142
    %v167 = vpack.c.b16 %v149, %v146
    %v168 = vpack.c.b16 %v150, %v147
    %v169 = vpack.c.b16 %v151, %v148
    %v170 = vpack.c.b16 %v155, %v152
    %v171 = vpack.c.b16 %v156, %v153
    %v172 = vpack.c.b16 %v157, %v154
    %v173 = vpack.c.b16 %v161, %v158
    %v174 = vpack.c.b16 %v162, %v159
    %v175 = vpack.c.b16 %v163, %v160
    %vm188 = vcmask 523264
    %v190 = vsel %vm188, %v120, 0
    %v193 = vsel %vm188, %v121, 0
    %v196 = vsel %vm188, %v122, 0
    %v199 = vsel %vm188, %v123, 0
    %201 = vmatprep.subr.bf16.mxu0 %v165
    %202 = vmatpush1.bf16.msra.mxu0 %v164
    %203 = vmatprep.subr.bf16.mxu0 %v168
    %204 = vmatpush1.bf16.msra.mxu0 %v167
    %205 = vmatprep.subr.bf16.mxu0 %v171
    %206 = vmatpush1.bf16.msra.mxu0 %v170
    %207 = vmatprep.subr.bf16.mxu0 %v174
    %208 = vmatpush1.bf16.msra.mxu0 %v173
    %209 = vmatprep.subr.bf16.mxu0 0
    %210 = vmatpush1.bf16.msra.mxu0 0
    %211 = vmatprep.subr.bf16.mxu0 0
    %212 = vmatpush1.bf16.msra.mxu0 0
    %213 = vmatprep.subr.bf16.mxu0 0
    %214 = vmatpush1.bf16.msra.mxu0 0
    %215 = vmatprep.subr.bf16.mxu0 0
    %216 = vmatpush1.bf16.msra.mxu0 0
    %217 = vmatprep.subr.bf16.mxu0 0
    %218 = vmatpush1.bf16.msra.mxu0 0
    %219 = vmatprep.subr.bf16.mxu0 0
    %220 = vmatpush1.bf16.msra.mxu0 0
    %221 = vmatprep.subr.bf16.mxu0 0
    %222 = vmatpush1.bf16.msra.mxu0 0
    %223 = vmatprep.subr.bf16.mxu0 0
    %224 = vmatpush1.bf16.msra.mxu0 0
    %225 = vmatprep.subr.bf16.mxu0 0
    %226 = vmatpush1.bf16.msra.mxu0 0
    %227 = vmatprep.subr.bf16.mxu0 0
    %228 = vmatpush1.bf16.msra.mxu0 0
    %229 = vmatprep.subr.bf16.mxu0 0
    %230 = vmatpush1.bf16.msra.mxu0 0
    %231 = vmatprep.subr.bf16.mxu0 0
    %232 = vmatpush1.bf16.msra.mxu0 0
    %233 = vmatprep.mubr.bf16.mxu0 0
    %234 = vmatmul.mubr.bf16.gmra.mrb[0].mxu0 %v190
    %v235 = vpop.f32.mrb[0].mxu0
    %v236 = vadd.f32 %v92, %v235
    %v237 = vpop.f32.mrb[0].mxu0
    %v238 = vadd.f32 %v96, %v237
    %v239 = vpop.f32.mrb[0].mxu0
    %v240 = vadd.f32 %v92, %v239
    %v241 = vpop.f32.mrb[0].mxu0
    %v242 = vadd.f32 %v96, %v241
    %243 = vmatprep.mubr.bf16.mxu0 0
    %244 = vmatmul.mubr.bf16.gmra.mrb[0].mxu0 %v193
    %v245 = vpop.f32.mrb[0].mxu0
    %v246 = vadd.f32 %v92, %v245
    %v247 = vpop.f32.mrb[0].mxu0
    %v248 = vadd.f32 %v96, %v247
    %v249 = vpop.f32.mrb[0].mxu0
    %v250 = vadd.f32 %v92, %v249
    %v251 = vpop.f32.mrb[0].mxu0
    %v252 = vadd.f32 %v96, %v251
    %253 = vmatprep.mubr.bf16.mxu0 0
    %254 = vmatmul.mubr.bf16.gmra.mrb[0].mxu0 %v196
    %v255 = vpop.f32.mrb[0].mxu0
    %v256 = vadd.f32 %v92, %v255
    %v257 = vpop.f32.mrb[0].mxu0
    %v258 = vadd.f32 %v96, %v257
    %v259 = vpop.f32.mrb[0].mxu0
    %v260 = vadd.f32 %v92, %v259
    %v261 = vpop.f32.mrb[0].mxu0
    %v262 = vadd.f32 %v96, %v261
    %263 = vmatprep.mubr.bf16.mxu0 0
    %264 = vmatmul.mubr.bf16.gmra.mrb[0].mxu0 %v199
    %v265 = vpop.f32.mrb[0].mxu0
    %v266 = vadd.f32 %v92, %v265
    %v267 = vpop.f32.mrb[0].mxu0
    %v268 = vadd.f32 %v96, %v267
    %v269 = vpop.f32.mrb[0].mxu0
    %v270 = vadd.f32 %v92, %v269
    %v271 = vpop.f32.mrb[0].mxu0
    %v272 = vadd.f32 %v96, %v271
    %273 = vdwg.mxu0
    %274 = vmatprep.subr.bf16.mxu0 0
    %275 = vmatpush1.bf16.msra.mxu0 %v166
    %276 = vmatprep.subr.bf16.mxu0 0
    %277 = vmatpush1.bf16.msra.mxu0 %v169
    %278 = vmatprep.subr.bf16.mxu0 0
    %279 = vmatpush1.bf16.msra.mxu0 %v172
    %280 = vmatprep.subr.bf16.mxu0 0
    %281 = vmatpush1.bf16.msra.mxu0 %v175
    %282 = vmatprep.subr.bf16.mxu0 0
    %283 = vmatpush1.bf16.msra.mxu0 0
    %284 = vmatprep.subr.bf16.mxu0 0
    %285 = vmatpush1.bf16.msra.mxu0 0
    %286 = vmatprep.subr.bf16.mxu0 0
    %287 = vmatpush1.bf16.msra.mxu0 0
    %288 = vmatprep.subr.bf16.mxu0 0
    %289 = vmatpush1.bf16.msra.mxu0 0
    %290 = vmatprep.subr.bf16.mxu0 0
    %291 = vmatpush1.bf16.msra.mxu0 0
    %292 = vmatprep.subr.bf16.mxu0 0
    %293 = vmatpush1.bf16.msra.mxu0 0
    %294 = vmatprep.subr.bf16.mxu0 0
    %295 = vmatpush1.bf16.msra.mxu0 0
    %296 = vmatprep.subr.bf16.mxu0 0
    %297 = vmatpush1.bf16.msra.mxu0 0
    %298 = vmatprep.subr.bf16.mxu0 0
    %299 = vmatpush1.bf16.msra.mxu0 0
    %300 = vmatprep.subr.bf16.mxu0 0
    %301 = vmatpush1.bf16.msra.mxu0 0
    %302 = vmatprep.subr.bf16.mxu0 0
    %303 = vmatpush1.bf16.msra.mxu0 0
    %304 = vmatprep.subr.bf16.mxu0 0
    %305 = vmatpush1.bf16.msra.mxu0 0
    %306 = vmatprep.mubr.bf16.mxu0 0
    %307 = vmatmul.mubr.bf16.gmra.mrb[0].mxu0 %v190
    %v308 = vpop.f32.mrb[0].mxu0
    %v309 = vadd.f32 %v100, %v308
    %v310 = vpop.f32.mrb[0].mxu0
    %v311 = vpop.f32.mrb[0].mxu0
    %v312 = vadd.f32 %v100, %v311
    %v313 = vpop.f32.mrb[0].mxu0
    %314 = vmatprep.mubr.bf16.mxu0 0
    %315 = vmatmul.mubr.bf16.gmra.mrb[0].mxu0 %v193
    %v316 = vpop.f32.mrb[0].mxu0
    %v317 = vadd.f32 %v100, %v316
    %v318 = vpop.f32.mrb[0].mxu0
    %v319 = vpop.f32.mrb[0].mxu0
    %v320 = vadd.f32 %v100, %v319
    %v321 = vpop.f32.mrb[0].mxu0
    %322 = vmatprep.mubr.bf16.mxu0 0
    %323 = vmatmul.mubr.bf16.gmra.mrb[0].mxu0 %v196
    %v324 = vpop.f32.mrb[0].mxu0
    %v325 = vadd.f32 %v100, %v324
    %v326 = vpop.f32.mrb[0].mxu0
    %v327 = vpop.f32.mrb[0].mxu0
    %v328 = vadd.f32 %v100, %v327
    %v329 = vpop.f32.mrb[0].mxu0
    %330 = vmatprep.mubr.bf16.mxu0 0
    %331 = vmatmul.mubr.bf16.gmra.mrb[0].mxu0 %v199
    %v332 = vpop.f32.mrb[0].mxu0
    %v333 = vadd.f32 %v100, %v332
    %v334 = vpop.f32.mrb[0].mxu0
    %v335 = vpop.f32.mrb[0].mxu0
    %v336 = vadd.f32 %v100, %v335
    %v337 = vpop.f32.mrb[0].mxu0
    %338 = vdwg.mxu0
    %339 = vst [vmem:[#allocation2] sm:$0xff] %v236
    %340 = vst [vmem:[#allocation2 + $0x8] sm:$0xff] %v238
    %341 = vst [vmem:[#allocation2 + $0x10] sm:$0xff] %v309
    %342 = vst [vmem:[#allocation2 + $0x18] sm:$0xff] %v240
    %343 = vst [vmem:[#allocation2 + $0x20] sm:$0xff] %v242
    %344 = vst [vmem:[#allocation2 + $0x28] sm:$0xff] %v312
    %345 = vst [vmem:[#allocation2 + $0x30] sm:$0xff] %v246
    %346 = vst [vmem:[#allocation2 + $0x38] sm:$0xff] %v248
    %347 = vst [vmem:[#allocation2 + $0x40] sm:$0xff] %v317
    %348 = vst [vmem:[#allocation2 + $0x48] sm:$0xff] %v250
    %349 = vst [vmem:[#allocation2 + $0x50] sm:$0xff] %v252
    %350 = vst [vmem:[#allocation2 + $0x58] sm:$0xff] %v320
    %351 = vst [vmem:[#allocation2 + $0x60] sm:$0xff] %v256
    %352 = vst [vmem:[#allocation2 + $0x68] sm:$0xff] %v258
    %353 = vst [vmem:[#allocation2 + $0x70] sm:$0xff] %v325
    %354 = vst [vmem:[#allocation2 + $0x78] sm:$0xff] %v260
    %355 = vst [vmem:[#allocation2 + $0x80] sm:$0xff] %v262
    %356 = vst [vmem:[#allocation2 + $0x88] sm:$0xff] %v328
    %357 = vst [vmem:[#allocation2 + $0x90] sm:$0xff] %v266
    %358 = vst [vmem:[#allocation2 + $0x98] sm:$0xff] %v268
    %359 = vst [vmem:[#allocation2 + $0xa0] sm:$0xff] %v333
    %360 = vst [vmem:[#allocation2 + $0xa8] sm:$0xff] %v270
    %361 = vst [vmem:[#allocation2 + $0xb0] sm:$0xff] %v272
    %362 = vst [vmem:[#allocation2 + $0xb8] sm:$0xff] %v336
    %v363 = vld [vmem:[%s4] sm:$0x1]
    %v365 = vlaneseq
    %v366 = vshrl.u32 %v365, 7
    %v367 = vsub.s32 0, %v366
    %v368 = vrot.slane %v363, %v367
    %s370 = smul.u32 0, 3
    %s371 = smul.addr %s370, 8
    %s372 = scalar_lea.vmem [#allocation2], %s371
    %v373 = vld [vmem:[%s372] sm:$0xff]
    %v374 = vld [vmem:[%s372 + $0x8] sm:$0xff]
    %v375 = vld [vmem:[%s372 + $0x10] sm:$0xff]
    %v376 = vld [vmem:[#allocation8] sm:$0xff]
    %v377 = vld [vmem:[#allocation8 + $0x8] sm:$0xf]
    %v378 = vld [vmem:[#allocation8 + $0xc] sm:$0xff]
    %v379 = vld [vmem:[#allocation8 + $0x14] sm:$0xf]
    %v380 = vld [vmem:[#allocation8 + $0x18] sm:$0xff]
    %v381 = vld [vmem:[#allocation8 + $0x20] sm:$0xf]
    %v382 = vld [vmem:[#allocation8 + $0x24] sm:$0xff]
    %v383 = vld [vmem:[#allocation8 + $0x2c] sm:$0xf]
    %v384 = vld [vmem:[#allocation8 + $0x30] sm:$0xff]
    %v385 = vld [vmem:[#allocation8 + $0x38] sm:$0xf]
    %v386 = vld [vmem:[#allocation8 + $0x3c] sm:$0xff]
    %v387 = vld [vmem:[#allocation8 + $0x44] sm:$0xf]
    %v388 = vld [vmem:[#allocation8 + $0x48] sm:$0xff]
    %v389 = vld [vmem:[#allocation8 + $0x50] sm:$0xf]
    %v390 = vld [vmem:[#allocation8 + $0x54] sm:$0xff]
    %v391 = vld [vmem:[#allocation8 + $0x5c] sm:$0xf]
    %v392 = vld [vmem:[#allocation8 + $0x60] sm:$0xff]
    %v393 = vld [vmem:[#allocation8 + $0x68] sm:$0xf]
    %v394 = vld [vmem:[#allocation8 + $0x6c] sm:$0xff]
    %v395 = vld [vmem:[#allocation8 + $0x74] sm:$0xf]
    %v396 = vld [vmem:[#allocation8 + $0x78] sm:$0xff]
    %v397 = vld [vmem:[#allocation8 + $0x80] sm:$0xf]
    %v398 = vld [vmem:[#allocation8 + $0x84] sm:$0xff]
    %v399 = vld [vmem:[#allocation8 + $0x8c] sm:$0xf]
    %v400 = vld [vmem:[#allocation8 + $0x90] sm:$0xff]
    %v401 = vld [vmem:[#allocation8 + $0x98] sm:$0xf]
    %v402 = vld [vmem:[#allocation8 + $0x9c] sm:$0xff]
    %v403 = vld [vmem:[#allocation8 + $0xa4] sm:$0xf]
    %v404 = vld [vmem:[#allocation8 + $0xa8] sm:$0xff]
    %v405 = vld [vmem:[#allocation8 + $0xb0] sm:$0xf]
    %v406 = vld [vmem:[#allocation8 + $0xb4] sm:$0xff]
    %v407 = vld [vmem:[#allocation8 + $0xbc] sm:$0xf]
    %v440 = vunpack.c.l.b16 %v376
    %v441 = vunpack.c.h.b16 %v376
    %v442 = vunpack.c.l.b16 %v377
    %v443 = vunpack.c.l.b16 %v378
    %v444 = vunpack.c.h.b16 %v378
    %v445 = vunpack.c.l.b16 %v379
    %v446 = vunpack.c.l.b16 %v380
    %v447 = vunpack.c.h.b16 %v380
    %v448 = vunpack.c.l.b16 %v381
    %v449 = vunpack.c.l.b16 %v382
    %v450 = vunpack.c.h.b16 %v382
    %v451 = vunpack.c.l.b16 %v383
    %v452 = vunpack.c.l.b16 %v384
    %v453 = vunpack.c.h.b16 %v384
    %v454 = vunpack.c.l.b16 %v385
    %v455 = vunpack.c.l.b16 %v386
    %v456 = vunpack.c.h.b16 %v386
    %v457 = vunpack.c.l.b16 %v387
    %v458 = vunpack.c.l.b16 %v388
    %v459 = vunpack.c.h.b16 %v388
    %v460 = vunpack.c.l.b16 %v389
    %v461 = vunpack.c.l.b16 %v390
    %v462 = vunpack.c.h.b16 %v390
    %v463 = vunpack.c.l.b16 %v391
    %v464 = vunpack.c.l.b16 %v392
    %v465 = vunpack.c.h.b16 %v392
    %v466 = vunpack.c.l.b16 %v393
    %v467 = vunpack.c.l.b16 %v394
    %v468 = vunpack.c.h.b16 %v394
    %v469 = vunpack.c.l.b16 %v395
    %v470 = vunpack.c.l.b16 %v396
    %v471 = vunpack.c.h.b16 %v396
    %v472 = vunpack.c.l.b16 %v397
    %v473 = vunpack.c.l.b16 %v398
    %v474 = vunpack.c.h.b16 %v398
    %v475 = vunpack.c.l.b16 %v399
    %v476 = vunpack.c.l.b16 %v400
    %v477 = vunpack.c.h.b16 %v400
    %v478 = vunpack.c.l.b16 %v401
    %v479 = vunpack.c.l.b16 %v402
    %v480 = vunpack.c.h.b16 %v402
    %v481 = vunpack.c.l.b16 %v403
    %v482 = vunpack.c.l.b16 %v404
    %v483 = vunpack.c.h.b16 %v404
    %v484 = vunpack.c.l.b16 %v405
    %v485 = vunpack.c.l.b16 %v406
    %v486 = vunpack.c.h.b16 %v406
    %v487 = vunpack.c.l.b16 %v407
    %v488 = vpack.c.b16 %v443, %v440
    %v489 = vpack.c.b16 %v444, %v441
    %v490 = vpack.c.b16 %v445, %v442
    %v491 = vpack.c.b16 %v449, %v446
    %v492 = vpack.c.b16 %v450, %v447
    %v493 = vpack.c.b16 %v451, %v448
    %v494 = vpack.c.b16 %v455, %v452
    %v495 = vpack.c.b16 %v456, %v453
    %v496 = vpack.c.b16 %v457, %v454
    %v497 = vpack.c.b16 %v461, %v458
    %v498 = vpack.c.b16 %v462, %v459
    %v499 = vpack.c.b16 %v463, %v460
    %v500 = vpack.c.b16 %v467, %v464
    %v501 = vpack.c.b16 %v468, %v465
    %v502 = vpack.c.b16 %v469, %v466
    %v503 = vpack.c.b16 %v473, %v470
    %v504 = vpack.c.b16 %v474, %v471
    %v505 = vpack.c.b16 %v475, %v472
    %v506 = vpack.c.b16 %v479, %v476
    %v507 = vpack.c.b16 %v480, %v477
    %v508 = vpack.c.b16 %v481, %v478
    %v509 = vpack.c.b16 %v485, %v482
    %v510 = vpack.c.b16 %v486, %v483
    %v511 = vpack.c.b16 %v487, %v484
    %536 = vmatprep.subr.bf16.mxu0 %v489
    %537 = vmatpush1.bf16.msra.mxu0 %v488
    %538 = vmatprep.subr.bf16.mxu0 %v492
    %539 = vmatpush1.bf16.msra.mxu0 %v491
    %540 = vmatprep.subr.bf16.mxu0 %v495
    %541 = vmatpush1.bf16.msra.mxu0 %v494
    %542 = vmatprep.subr.bf16.mxu0 %v498
    %543 = vmatpush1.bf16.msra.mxu0 %v497
    %544 = vmatprep.subr.bf16.mxu0 %v501
    %545 = vmatpush1.bf16.msra.mxu0 %v500
    %546 = vmatprep.subr.bf16.mxu0 %v504
    %547 = vmatpush1.bf16.msra.mxu0 %v503
    %548 = vmatprep.subr.bf16.mxu0 %v507
    %549 = vmatpush1.bf16.msra.mxu0 %v506
    %550 = vmatprep.subr.bf16.mxu0 %v510
    %551 = vmatpush1.bf16.msra.mxu0 %v509
    %552 = vmatprep.subr.bf16.mxu0 0
    %553 = vmatpush1.bf16.msra.mxu0 0
    %554 = vmatprep.subr.bf16.mxu0 0
    %555 = vmatpush1.bf16.msra.mxu0 0
    %556 = vmatprep.subr.bf16.mxu0 0
    %557 = vmatpush1.bf16.msra.mxu0 0
    %558 = vmatprep.subr.bf16.mxu0 0
    %559 = vmatpush1.bf16.msra.mxu0 0
    %560 = vmatprep.subr.bf16.mxu0 0
    %561 = vmatpush1.bf16.msra.mxu0 0
    %562 = vmatprep.subr.bf16.mxu0 0
    %563 = vmatpush1.bf16.msra.mxu0 0
    %564 = vmatprep.subr.bf16.mxu0 0
    %565 = vmatpush1.bf16.msra.mxu0 0
    %566 = vmatprep.subr.bf16.mxu0 0
    %567 = vmatpush1.bf16.msra.mxu0 0
    %568 = vmatprep.mubr.bf16.mxu0 0
    %569 = vmatmul.mubr.bf16.gmra.mrb[0].mxu0 0
    %v570 = vpop.f32.mrb[0].mxu0
    %v571 = vadd.f32 0.0, %v570
    %v572 = vpop.f32.mrb[0].mxu0
    %v573 = vadd.f32 0.0, %v572
    %v574 = vpop.f32.mrb[0].mxu0
    %v575 = vpop.f32.mrb[0].mxu0
    %576 = vdwg.mxu0
    %577 = vmatprep.subr.bf16.mxu0 0
    %578 = vmatpush1.bf16.msra.mxu0 %v490
    %579 = vmatprep.subr.bf16.mxu0 0
    %580 = vmatpush1.bf16.msra.mxu0 %v493
    %581 = vmatprep.subr.bf16.mxu0 0
    %582 = vmatpush1.bf16.msra.mxu0 %v496
    %583 = vmatprep.subr.bf16.mxu0 0
    %584 = vmatpush1.bf16.msra.mxu0 %v499
    %585 = vmatprep.subr.bf16.mxu0 0
    %586 = vmatpush1.bf16.msra.mxu0 %v502
    %587 = vmatprep.subr.bf16.mxu0 0
    %588 = vmatpush1.bf16.msra.mxu0 %v505
    %589 = vmatprep.subr.bf16.mxu0 0
    %590 = vmatpush1.bf16.msra.mxu0 %v508
    %591 = vmatprep.subr.bf16.mxu0 0
    %592 = vmatpush1.bf16.msra.mxu0 %v511
    %593 = vmatprep.subr.bf16.mxu0 0
    %594 = vmatpush1.bf16.msra.mxu0 0
    %595 = vmatprep.subr.bf16.mxu0 0
    %596 = vmatpush1.bf16.msra.mxu0 0
    %597 = vmatprep.subr.bf16.mxu0 0
    %598 = vmatpush1.bf16.msra.mxu0 0
    %599 = vmatprep.subr.bf16.mxu0 0
    %600 = vmatpush1.bf16.msra.mxu0 0
    %601 = vmatprep.subr.bf16.mxu0 0
    %602 = vmatpush1.bf16.msra.mxu0 0
    %603 = vmatprep.subr.bf16.mxu0 0
    %604 = vmatpush1.bf16.msra.mxu0 0
    %605 = vmatprep.subr.bf16.mxu0 0
    %606 = vmatpush1.bf16.msra.mxu0 0
    %607 = vmatprep.subr.bf16.mxu0 0
    %608 = vmatpush1.bf16.msra.mxu0 0
    %609 = vmatprep.mubr.bf16.mxu0 0
    %610 = vmatmul.mubr.bf16.gmra.mrb[0].mxu0 0
    %v611 = vpop.f32.mrb[0].mxu0
    %v612 = vadd.f32 0.0, %v611
    %v613 = vpop.f32.mrb[0].mxu0
    %v614 = vpop.f32.mrb[0].mxu0
    %v615 = vpop.f32.mrb[0].mxu0
    %616 = vdwg.mxu0
    %v617 = vadd.f32 %v373, %v571
    %v618 = vxor.u32 %v617, 2147483648
    %v619 = vmul.f32 %v618, 1.442695
    %v620 = vpow.pop %v619
    %v621 = vadd.f32 %v620, 1.0
    %v622 = vrcp.pop %v621
    %v623 = vmul.f32 1.0, %v622
    %v624 = vadd.f32 %v374, %v573
    %v625 = vxor.u32 %v624, 2147483648
    %v626 = vmul.f32 %v625, 1.442695
    %v627 = vpow.pop %v626
    %v628 = vadd.f32 %v627, 1.0
    %v629 = vrcp.pop %v628
    %v630 = vmul.f32 1.0, %v629
    %v631 = vadd.f32 %v612, %v368
    %v632 = vmul.f32 %v623, %v631
    %v633 = vadd.f32 %v375, %v632
    %v634 = vtanh.pop %v633
    %v635 = vsub.f32 1.0, %v630
    %v636 = vmul.f32 %v635, %v634
    %v637 = vmul.f32 %v630, 0.0
    %v638 = vadd.f32 %v636, %v637
    %s639 = smul.u32 1, 3
    %s640 = smul.addr %s639, 8
    %s641 = scalar_lea.vmem [#allocation2], %s640
    %v642 = vld [vmem:[%s641] sm:$0xff]
    %v643 = vld [vmem:[%s641 + $0x8] sm:$0xff]
    %v644 = vld [vmem:[%s641 + $0x10] sm:$0xff]
    %v645 = vpack.c.bf16 %v638, %v638
    %646 = vmatprep.subr.bf16.mxu0 %v489
    %647 = vmatpush1.bf16.msra.mxu0 %v488
    %648 = vmatprep.subr.bf16.mxu0 %v492
    %649 = vmatpush1.bf16.msra.mxu0 %v491
    %650 = vmatprep.subr.bf16.mxu0 %v495
    %651 = vmatpush1.bf16.msra.mxu0 %v494
    %652 = vmatprep.subr.bf16.mxu0 %v498
    %653 = vmatpush1.bf16.msra.mxu0 %v497
    %654 = vmatprep.subr.bf16.mxu0 %v501
    %655 = vmatpush1.bf16.msra.mxu0 %v500
    %656 = vmatprep.subr.bf16.mxu0 %v504
    %657 = vmatpush1.bf16.msra.mxu0 %v503
    %658 = vmatprep.subr.bf16.mxu0 %v507
    %659 = vmatpush1.bf16.msra.mxu0 %v506
    %660 = vmatprep.subr.bf16.mxu0 %v510
    %661 = vmatpush1.bf16.msra.mxu0 %v509
    %662 = vmatprep.subr.bf16.mxu0 0
    %663 = vmatpush1.bf16.msra.mxu0 0
    %664 = vmatprep.subr.bf16.mxu0 0
    %665 = vmatpush1.bf16.msra.mxu0 0
    %666 = vmatprep.subr.bf16.mxu0 0
    %667 = vmatpush1.bf16.msra.mxu0 0
    %668 = vmatprep.subr.bf16.mxu0 0
    %669 = vmatpush1.bf16.msra.mxu0 0
    %670 = vmatprep.subr.bf16.mxu0 0
    %671 = vmatpush1.bf16.msra.mxu0 0
    %672 = vmatprep.subr.bf16.mxu0 0
    %673 = vmatpush1.bf16.msra.mxu0 0
    %674 = vmatprep.subr.bf16.mxu0 0
    %675 = vmatpush1.bf16.msra.mxu0 0
    %676 = vmatprep.subr.bf16.mxu0 0
    %677 = vmatpush1.bf16.msra.mxu0 0
    %678 = vmatprep.mubr.bf16.mxu0 0
    %679 = vmatmul.mubr.bf16.gmra.mrb[0].mxu0 %v645
    %v680 = vpop.f32.mrb[0].mxu0
    %v681 = vadd.f32 0.0, %v680
    %v682 = vpop.f32.mrb[0].mxu0
    %v683 = vadd.f32 0.0, %v682
    %v684 = vpop.f32.mrb[0].mxu0
    %v685 = vpop.f32.mrb[0].mxu0
    %686 = vdwg.mxu0
    %687 = vmatprep.subr.bf16.mxu0 0
    %688 = vmatpush1.bf16.msra.mxu0 %v490
    %689 = vmatprep.subr.bf16.mxu0 0
    %690 = vmatpush1.bf16.msra.mxu0 %v493
    %691 = vmatprep.subr.bf16.mxu0 0
    %692 = vmatpush1.bf16.msra.mxu0 %v496
    %693 = vmatprep.subr.bf16.mxu0 0
    %694 = vmatpush1.bf16.msra.mxu0 %v499
    %695 = vmatprep.subr.bf16.mxu0 0
    %696 = vmatpush1.bf16.msra.mxu0 %v502
    %697 = vmatprep.subr.bf16.mxu0 0
    %698 = vmatpush1.bf16.msra.mxu0 %v505
    %699 = vmatprep.subr.bf16.mxu0 0
    %700 = vmatpush1.bf16.msra.mxu0 %v508
    %701 = vmatprep.subr.bf16.mxu0 0
    %702 = vmatpush1.bf16.msra.mxu0 %v511
    %703 = vmatprep.subr.bf16.mxu0 0
    %704 = vmatpush1.bf16.msra.mxu0 0
    %705 = vmatprep.subr.bf16.mxu0 0
    %706 = vmatpush1.bf16.msra.mxu0 0
    %707 = vmatprep.subr.bf16.mxu0 0
    %708 = vmatpush1.bf16.msra.mxu0 0
    %709 = vmatprep.subr.bf16.mxu0 0
    %710 = vmatpush1.bf16.msra.mxu0 0
    %711 = vmatprep.subr.bf16.mxu0 0
    %712 = vmatpush1.bf16.msra.mxu0 0
    %713 = vmatprep.subr.bf16.mxu0 0
    %714 = vmatpush1.bf16.msra.mxu0 0
    %715 = vmatprep.subr.bf16.mxu0 0
    %716 = vmatpush1.bf16.msra.mxu0 0
    %717 = vmatprep.subr.bf16.mxu0 0
    %718 = vmatpush1.bf16.msra.mxu0 0
    %719 = vmatprep.mubr.bf16.mxu0 0
    %720 = vmatmul.mubr.bf16.gmra.mrb[0].mxu0 %v645
    %v721 = vpop.f32.mrb[0].mxu0
    %v722 = vadd.f32 0.0, %v721
    %v723 = vpop.f32.mrb[0].mxu0
    %v724 = vpop.f32.mrb[0].mxu0
    %v725 = vpop.f32.mrb[0].mxu0
    %726 = vdwg.mxu0
    %v727 = vadd.f32 %v642, %v681
    %v728 = vxor.u32 %v727, 2147483648
    %v729 = vmul.f32 %v728, 1.442695
    %v730 = vpow.pop %v729
    %v731 = vadd.f32 %v730, 1.0
    %v732 = vrcp.pop %v731
    %v733 = vmul.f32 1.0, %v732
    %v734 = vadd.f32 %v643, %v683
    %v735 = vxor.u32 %v734, 2147483648
    %v736 = vmul.f32 %v735, 1.442695
    %v737 = vpow.pop %v736
    %v738 = vadd.f32 %v737, 1.0
    %v739 = vrcp.pop %v738
    %v740 = vmul.f32 1.0, %v739
    %v741 = vadd.f32 %v722, %v368
    %v742 = vmul.f32 %v733, %v741
    %v743 = vadd.f32 %v644, %v742
    %v744 = vtanh.pop %v743
    %v745 = vsub.f32 1.0, %v740
    %v746 = vmul.f32 %v745, %v744
    %v747 = vmul.f32 %v740, %v638
    %v748 = vadd.f32 %v746, %v747
    %s749 = smul.u32 2, 3
    %s750 = smul.addr %s749, 8
    %s751 = scalar_lea.vmem [#allocation2], %s750
    %v752 = vld [vmem:[%s751] sm:$0xff]
    %v753 = vld [vmem:[%s751 + $0x8] sm:$0xff]
    %v754 = vld [vmem:[%s751 + $0x10] sm:$0xff]
    %v755 = vpack.c.bf16 %v748, %v748
    %756 = vmatprep.subr.bf16.mxu0 %v489
    %757 = vmatpush1.bf16.msra.mxu0 %v488
    %758 = vmatprep.subr.bf16.mxu0 %v492
    %759 = vmatpush1.bf16.msra.mxu0 %v491
    %760 = vmatprep.subr.bf16.mxu0 %v495
    %761 = vmatpush1.bf16.msra.mxu0 %v494
    %762 = vmatprep.subr.bf16.mxu0 %v498
    %763 = vmatpush1.bf16.msra.mxu0 %v497
    %764 = vmatprep.subr.bf16.mxu0 %v501
    %765 = vmatpush1.bf16.msra.mxu0 %v500
    %766 = vmatprep.subr.bf16.mxu0 %v504
    %767 = vmatpush1.bf16.msra.mxu0 %v503
    %768 = vmatprep.subr.bf16.mxu0 %v507
    %769 = vmatpush1.bf16.msra.mxu0 %v506
    %770 = vmatprep.subr.bf16.mxu0 %v510
    %771 = vmatpush1.bf16.msra.mxu0 %v509
    %772 = vmatprep.subr.bf16.mxu0 0
    %773 = vmatpush1.bf16.msra.mxu0 0
    %774 = vmatprep.subr.bf16.mxu0 0
    %775 = vmatpush1.bf16.msra.mxu0 0
    %776 = vmatprep.subr.bf16.mxu0 0
    %777 = vmatpush1.bf16.msra.mxu0 0
    %778 = vmatprep.subr.bf16.mxu0 0
    %779 = vmatpush1.bf16.msra.mxu0 0
    %780 = vmatprep.subr.bf16.mxu0 0
    %781 = vmatpush1.bf16.msra.mxu0 0
    %782 = vmatprep.subr.bf16.mxu0 0
    %783 = vmatpush1.bf16.msra.mxu0 0
    %784 = vmatprep.subr.bf16.mxu0 0
    %785 = vmatpush1.bf16.msra.mxu0 0
    %786 = vmatprep.subr.bf16.mxu0 0
    %787 = vmatpush1.bf16.msra.mxu0 0
    %788 = vmatprep.mubr.bf16.mxu0 0
    %789 = vmatmul.mubr.bf16.gmra.mrb[0].mxu0 %v755
    %v790 = vpop.f32.mrb[0].mxu0
    %v791 = vadd.f32 0.0, %v790
    %v792 = vpop.f32.mrb[0].mxu0
    %v793 = vadd.f32 0.0, %v792
    %v794 = vpop.f32.mrb[0].mxu0
    %v795 = vpop.f32.mrb[0].mxu0
    %796 = vdwg.mxu0
    %797 = vmatprep.subr.bf16.mxu0 0
    %798 = vmatpush1.bf16.msra.mxu0 %v490
    %799 = vmatprep.subr.bf16.mxu0 0
    %800 = vmatpush1.bf16.msra.mxu0 %v493
    %801 = vmatprep.subr.bf16.mxu0 0
    %802 = vmatpush1.bf16.msra.mxu0 %v496
    %803 = vmatprep.subr.bf16.mxu0 0
    %804 = vmatpush1.bf16.msra.mxu0 %v499
    %805 = vmatprep.subr.bf16.mxu0 0
    %806 = vmatpush1.bf16.msra.mxu0 %v502
    %807 = vmatprep.subr.bf16.mxu0 0
    %808 = vmatpush1.bf16.msra.mxu0 %v505
    %809 = vmatprep.subr.bf16.mxu0 0
    %810 = vmatpush1.bf16.msra.mxu0 %v508
    %811 = vmatprep.subr.bf16.mxu0 0
    %812 = vmatpush1.bf16.msra.mxu0 %v511
    %813 = vmatprep.subr.bf16.mxu0 0
    %814 = vmatpush1.bf16.msra.mxu0 0
    %815 = vmatprep.subr.bf16.mxu0 0
    %816 = vmatpush1.bf16.msra.mxu0 0
    %817 = vmatprep.subr.bf16.mxu0 0
    %818 = vmatpush1.bf16.msra.mxu0 0
    %819 = vmatprep.subr.bf16.mxu0 0
    %820 = vmatpush1.bf16.msra.mxu0 0
    %821 = vmatprep.subr.bf16.mxu0 0
    %822 = vmatpush1.bf16.msra.mxu0 0
    %823 = vmatprep.subr.bf16.mxu0 0
    %824 = vmatpush1.bf16.msra.mxu0 0
    %825 = vmatprep.subr.bf16.mxu0 0
    %826 = vmatpush1.bf16.msra.mxu0 0
    %827 = vmatprep.subr.bf16.mxu0 0
    %828 = vmatpush1.bf16.msra.mxu0 0
    %829 = vmatprep.mubr.bf16.mxu0 0
    %830 = vmatmul.mubr.bf16.gmra.mrb[0].mxu0 %v755
    %v831 = vpop.f32.mrb[0].mxu0
    %v832 = vadd.f32 0.0, %v831
    %v833 = vpop.f32.mrb[0].mxu0
    %v834 = vpop.f32.mrb[0].mxu0
    %v835 = vpop.f32.mrb[0].mxu0
    %836 = vdwg.mxu0
    %v837 = vadd.f32 %v752, %v791
    %v838 = vxor.u32 %v837, 2147483648
    %v839 = vmul.f32 %v838, 1.442695
    %v840 = vpow.pop %v839
    %v841 = vadd.f32 %v840, 1.0
    %v842 = vrcp.pop %v841
    %v843 = vmul.f32 1.0, %v842
    %v844 = vadd.f32 %v753, %v793
    %v845 = vxor.u32 %v844, 2147483648
    %v846 = vmul.f32 %v845, 1.442695
    %v847 = vpow.pop %v846
    %v848 = vadd.f32 %v847, 1.0
    %v849 = vrcp.pop %v848
    %v850 = vmul.f32 1.0, %v849
    %v851 = vadd.f32 %v832, %v368
    %v852 = vmul.f32 %v843, %v851
    %v853 = vadd.f32 %v754, %v852
    %v854 = vtanh.pop %v853
    %v855 = vsub.f32 1.0, %v850
    %v856 = vmul.f32 %v855, %v854
    %v857 = vmul.f32 %v850, %v748
    %v858 = vadd.f32 %v856, %v857
    %s859 = smul.u32 3, 3
    %s860 = smul.addr %s859, 8
    %s861 = scalar_lea.vmem [#allocation2], %s860
    %v862 = vld [vmem:[%s861] sm:$0xff]
    %v863 = vld [vmem:[%s861 + $0x8] sm:$0xff]
    %v864 = vld [vmem:[%s861 + $0x10] sm:$0xff]
    %v865 = vpack.c.bf16 %v858, %v858
    %866 = vmatprep.subr.bf16.mxu0 %v489
    %867 = vmatpush1.bf16.msra.mxu0 %v488
    %868 = vmatprep.subr.bf16.mxu0 %v492
    %869 = vmatpush1.bf16.msra.mxu0 %v491
    %870 = vmatprep.subr.bf16.mxu0 %v495
    %871 = vmatpush1.bf16.msra.mxu0 %v494
    %872 = vmatprep.subr.bf16.mxu0 %v498
    %873 = vmatpush1.bf16.msra.mxu0 %v497
    %874 = vmatprep.subr.bf16.mxu0 %v501
    %875 = vmatpush1.bf16.msra.mxu0 %v500
    %876 = vmatprep.subr.bf16.mxu0 %v504
    %877 = vmatpush1.bf16.msra.mxu0 %v503
    %878 = vmatprep.subr.bf16.mxu0 %v507
    %879 = vmatpush1.bf16.msra.mxu0 %v506
    %880 = vmatprep.subr.bf16.mxu0 %v510
    %881 = vmatpush1.bf16.msra.mxu0 %v509
    %882 = vmatprep.subr.bf16.mxu0 0
    %883 = vmatpush1.bf16.msra.mxu0 0
    %884 = vmatprep.subr.bf16.mxu0 0
    %885 = vmatpush1.bf16.msra.mxu0 0
    %886 = vmatprep.subr.bf16.mxu0 0
    %887 = vmatpush1.bf16.msra.mxu0 0
    %888 = vmatprep.subr.bf16.mxu0 0
    %889 = vmatpush1.bf16.msra.mxu0 0
    %890 = vmatprep.subr.bf16.mxu0 0
    %891 = vmatpush1.bf16.msra.mxu0 0
    %892 = vmatprep.subr.bf16.mxu0 0
    %893 = vmatpush1.bf16.msra.mxu0 0
    %894 = vmatprep.subr.bf16.mxu0 0
    %895 = vmatpush1.bf16.msra.mxu0 0
    %896 = vmatprep.subr.bf16.mxu0 0
    %897 = vmatpush1.bf16.msra.mxu0 0
    %898 = vmatprep.mubr.bf16.mxu0 0
    %899 = vmatmul.mubr.bf16.gmra.mrb[0].mxu0 %v865
    %v900 = vpop.f32.mrb[0].mxu0
    %v901 = vadd.f32 0.0, %v900
    %v902 = vpop.f32.mrb[0].mxu0
    %v903 = vadd.f32 0.0, %v902
    %v904 = vpop.f32.mrb[0].mxu0
    %v905 = vpop.f32.mrb[0].mxu0
    %906 = vdwg.mxu0
    %907 = vmatprep.subr.bf16.mxu0 0
    %908 = vmatpush1.bf16.msra.mxu0 %v490
    %909 = vmatprep.subr.bf16.mxu0 0
    %910 = vmatpush1.bf16.msra.mxu0 %v493
    %911 = vmatprep.subr.bf16.mxu0 0
    %912 = vmatpush1.bf16.msra.mxu0 %v496
    %913 = vmatprep.subr.bf16.mxu0 0
    %914 = vmatpush1.bf16.msra.mxu0 %v499
    %915 = vmatprep.subr.bf16.mxu0 0
    %916 = vmatpush1.bf16.msra.mxu0 %v502
    %917 = vmatprep.subr.bf16.mxu0 0
    %918 = vmatpush1.bf16.msra.mxu0 %v505
    %919 = vmatprep.subr.bf16.mxu0 0
    %920 = vmatpush1.bf16.msra.mxu0 %v508
    %921 = vmatprep.subr.bf16.mxu0 0
    %922 = vmatpush1.bf16.msra.mxu0 %v511
    %923 = vmatprep.subr.bf16.mxu0 0
    %924 = vmatpush1.bf16.msra.mxu0 0
    %925 = vmatprep.subr.bf16.mxu0 0
    %926 = vmatpush1.bf16.msra.mxu0 0
    %927 = vmatprep.subr.bf16.mxu0 0
    %928 = vmatpush1.bf16.msra.mxu0 0
    %929 = vmatprep.subr.bf16.mxu0 0
    %930 = vmatpush1.bf16.msra.mxu0 0
    %931 = vmatprep.subr.bf16.mxu0 0
    %932 = vmatpush1.bf16.msra.mxu0 0
    %933 = vmatprep.subr.bf16.mxu0 0
    %934 = vmatpush1.bf16.msra.mxu0 0
    %935 = vmatprep.subr.bf16.mxu0 0
    %936 = vmatpush1.bf16.msra.mxu0 0
    %937 = vmatprep.subr.bf16.mxu0 0
    %938 = vmatpush1.bf16.msra.mxu0 0
    %939 = vmatprep.mubr.bf16.mxu0 0
    %940 = vmatmul.mubr.bf16.gmra.mrb[0].mxu0 %v865
    %v941 = vpop.f32.mrb[0].mxu0
    %v942 = vadd.f32 0.0, %v941
    %v943 = vpop.f32.mrb[0].mxu0
    %v944 = vpop.f32.mrb[0].mxu0
    %v945 = vpop.f32.mrb[0].mxu0
    %946 = vdwg.mxu0
    %v947 = vadd.f32 %v862, %v901
    %v948 = vxor.u32 %v947, 2147483648
    %v949 = vmul.f32 %v948, 1.442695
    %v950 = vpow.pop %v949
    %v951 = vadd.f32 %v950, 1.0
    %v952 = vrcp.pop %v951
    %v953 = vmul.f32 1.0, %v952
    %v954 = vadd.f32 %v863, %v903
    %v955 = vxor.u32 %v954, 2147483648
    %v956 = vmul.f32 %v955, 1.442695
    %v957 = vpow.pop %v956
    %v958 = vadd.f32 %v957, 1.0
    %v959 = vrcp.pop %v958
    %v960 = vmul.f32 1.0, %v959
    %v961 = vadd.f32 %v942, %v368
    %v962 = vmul.f32 %v953, %v961
    %v963 = vadd.f32 %v864, %v962
    %v964 = vtanh.pop %v963
    %v965 = vsub.f32 1.0, %v960
    %v966 = vmul.f32 %v965, %v964
    %v967 = vmul.f32 %v960, %v858
    %v968 = vadd.f32 %v966, %v967
    %s969 = smul.u32 4, 3
    %s970 = smul.addr %s969, 8
    %s971 = scalar_lea.vmem [#allocation2], %s970
    %v972 = vld [vmem:[%s971] sm:$0xff]
    %v973 = vld [vmem:[%s971 + $0x8] sm:$0xff]
    %v974 = vld [vmem:[%s971 + $0x10] sm:$0xff]
    %v975 = vpack.c.bf16 %v968, %v968
    %976 = vmatprep.subr.bf16.mxu0 %v489
    %977 = vmatpush1.bf16.msra.mxu0 %v488
    %978 = vmatprep.subr.bf16.mxu0 %v492
    %979 = vmatpush1.bf16.msra.mxu0 %v491
    %980 = vmatprep.subr.bf16.mxu0 %v495
    %981 = vmatpush1.bf16.msra.mxu0 %v494
    %982 = vmatprep.subr.bf16.mxu0 %v498
    %983 = vmatpush1.bf16.msra.mxu0 %v497
    %984 = vmatprep.subr.bf16.mxu0 %v501
    %985 = vmatpush1.bf16.msra.mxu0 %v500
    %986 = vmatprep.subr.bf16.mxu0 %v504
    %987 = vmatpush1.bf16.msra.mxu0 %v503
    %988 = vmatprep.subr.bf16.mxu0 %v507
    %989 = vmatpush1.bf16.msra.mxu0 %v506
    %990 = vmatprep.subr.bf16.mxu0 %v510
    %991 = vmatpush1.bf16.msra.mxu0 %v509
    %992 = vmatprep.subr.bf16.mxu0 0
    %993 = vmatpush1.bf16.msra.mxu0 0
    %994 = vmatprep.subr.bf16.mxu0 0
    %995 = vmatpush1.bf16.msra.mxu0 0
    %996 = vmatprep.subr.bf16.mxu0 0
    %997 = vmatpush1.bf16.msra.mxu0 0
    %998 = vmatprep.subr.bf16.mxu0 0
    %999 = vmatpush1.bf16.msra.mxu0 0
    %1000 = vmatprep.subr.bf16.mxu0 0
    %1001 = vmatpush1.bf16.msra.mxu0 0
    %1002 = vmatprep.subr.bf16.mxu0 0
    %1003 = vmatpush1.bf16.msra.mxu0 0
    %1004 = vmatprep.subr.bf16.mxu0 0
    %1005 = vmatpush1.bf16.msra.mxu0 0
    %1006 = vmatprep.subr.bf16.mxu0 0
    %1007 = vmatpush1.bf16.msra.mxu0 0
    %1008 = vmatprep.mubr.bf16.mxu0 0
    %1009 = vmatmul.mubr.bf16.gmra.mrb[0].mxu0 %v975
    %v1010 = vpop.f32.mrb[0].mxu0
    %v1011 = vadd.f32 0.0, %v1010
    %v1012 = vpop.f32.mrb[0].mxu0
    %v1013 = vadd.f32 0.0, %v1012
    %v1014 = vpop.f32.mrb[0].mxu0
    %v1015 = vpop.f32.mrb[0].mxu0
    %1016 = vdwg.mxu0
    %1017 = vmatprep.subr.bf16.mxu0 0
    %1018 = vmatpush1.bf16.msra.mxu0 %v490
    %1019 = vmatprep.subr.bf16.mxu0 0
    %1020 = vmatpush1.bf16.msra.mxu0 %v493
    %1021 = vmatprep.subr.bf16.mxu0 0
    %1022 = vmatpush1.bf16.msra.mxu0 %v496
    %1023 = vmatprep.subr.bf16.mxu0 0
    %1024 = vmatpush1.bf16.msra.mxu0 %v499
    %1025 = vmatprep.subr.bf16.mxu0 0
    %1026 = vmatpush1.bf16.msra.mxu0 %v502
    %1027 = vmatprep.subr.bf16.mxu0 0
    %1028 = vmatpush1.bf16.msra.mxu0 %v505
    %1029 = vmatprep.subr.bf16.mxu0 0
    %1030 = vmatpush1.bf16.msra.mxu0 %v508
    %1031 = vmatprep.subr.bf16.mxu0 0
    %1032 = vmatpush1.bf16.msra.mxu0 %v511
    %1033 = vmatprep.subr.bf16.mxu0 0
    %1034 = vmatpush1.bf16.msra.mxu0 0
    %1035 = vmatprep.subr.bf16.mxu0 0
    %1036 = vmatpush1.bf16.msra.mxu0 0
    %1037 = vmatprep.subr.bf16.mxu0 0
    %1038 = vmatpush1.bf16.msra.mxu0 0
    %1039 = vmatprep.subr.bf16.mxu0 0
    %1040 = vmatpush1.bf16.msra.mxu0 0
    %1041 = vmatprep.subr.bf16.mxu0 0
    %1042 = vmatpush1.bf16.msra.mxu0 0
    %1043 = vmatprep.subr.bf16.mxu0 0
    %1044 = vmatpush1.bf16.msra.mxu0 0
    %1045 = vmatprep.subr.bf16.mxu0 0
    %1046 = vmatpush1.bf16.msra.mxu0 0
    %1047 = vmatprep.subr.bf16.mxu0 0
    %1048 = vmatpush1.bf16.msra.mxu0 0
    %1049 = vmatprep.mubr.bf16.mxu0 0
    %1050 = vmatmul.mubr.bf16.gmra.mrb[0].mxu0 %v975
    %v1051 = vpop.f32.mrb[0].mxu0
    %v1052 = vadd.f32 0.0, %v1051
    %v1053 = vpop.f32.mrb[0].mxu0
    %v1054 = vpop.f32.mrb[0].mxu0
    %v1055 = vpop.f32.mrb[0].mxu0
    %1056 = vdwg.mxu0
    %v1057 = vadd.f32 %v972, %v1011
    %v1058 = vxor.u32 %v1057, 2147483648
    %v1059 = vmul.f32 %v1058, 1.442695
    %v1060 = vpow.pop %v1059
    %v1061 = vadd.f32 %v1060, 1.0
    %v1062 = vrcp.pop %v1061
    %v1063 = vmul.f32 1.0, %v1062
    %v1064 = vadd.f32 %v973, %v1013
    %v1065 = vxor.u32 %v1064, 2147483648
    %v1066 = vmul.f32 %v1065, 1.442695
    %v1067 = vpow.pop %v1066
    %v1068 = vadd.f32 %v1067, 1.0
    %v1069 = vrcp.pop %v1068
    %v1070 = vmul.f32 1.0, %v1069
    %v1071 = vadd.f32 %v1052, %v368
    %v1072 = vmul.f32 %v1063, %v1071
    %v1073 = vadd.f32 %v974, %v1072
    %v1074 = vtanh.pop %v1073
    %v1075 = vsub.f32 1.0, %v1070
    %v1076 = vmul.f32 %v1075, %v1074
    %v1077 = vmul.f32 %v1070, %v968
    %v1078 = vadd.f32 %v1076, %v1077
    %s1079 = smul.u32 5, 3
    %s1080 = smul.addr %s1079, 8
    %s1081 = scalar_lea.vmem [#allocation2], %s1080
    %v1082 = vld [vmem:[%s1081] sm:$0xff]
    %v1083 = vld [vmem:[%s1081 + $0x8] sm:$0xff]
    %v1084 = vld [vmem:[%s1081 + $0x10] sm:$0xff]
    %v1085 = vpack.c.bf16 %v1078, %v1078
    %1086 = vmatprep.subr.bf16.mxu0 %v489
    %1087 = vmatpush1.bf16.msra.mxu0 %v488
    %1088 = vmatprep.subr.bf16.mxu0 %v492
    %1089 = vmatpush1.bf16.msra.mxu0 %v491
    %1090 = vmatprep.subr.bf16.mxu0 %v495
    %1091 = vmatpush1.bf16.msra.mxu0 %v494
    %1092 = vmatprep.subr.bf16.mxu0 %v498
    %1093 = vmatpush1.bf16.msra.mxu0 %v497
    %1094 = vmatprep.subr.bf16.mxu0 %v501
    %1095 = vmatpush1.bf16.msra.mxu0 %v500
    %1096 = vmatprep.subr.bf16.mxu0 %v504
    %1097 = vmatpush1.bf16.msra.mxu0 %v503
    %1098 = vmatprep.subr.bf16.mxu0 %v507
    %1099 = vmatpush1.bf16.msra.mxu0 %v506
    %1100 = vmatprep.subr.bf16.mxu0 %v510
    %1101 = vmatpush1.bf16.msra.mxu0 %v509
    %1102 = vmatprep.subr.bf16.mxu0 0
    %1103 = vmatpush1.bf16.msra.mxu0 0
    %1104 = vmatprep.subr.bf16.mxu0 0
    %1105 = vmatpush1.bf16.msra.mxu0 0
    %1106 = vmatprep.subr.bf16.mxu0 0
    %1107 = vmatpush1.bf16.msra.mxu0 0
    %1108 = vmatprep.subr.bf16.mxu0 0
    %1109 = vmatpush1.bf16.msra.mxu0 0
    %1110 = vmatprep.subr.bf16.mxu0 0
    %1111 = vmatpush1.bf16.msra.mxu0 0
    %1112 = vmatprep.subr.bf16.mxu0 0
    %1113 = vmatpush1.bf16.msra.mxu0 0
    %1114 = vmatprep.subr.bf16.mxu0 0
    %1115 = vmatpush1.bf16.msra.mxu0 0
    %1116 = vmatprep.subr.bf16.mxu0 0
    %1117 = vmatpush1.bf16.msra.mxu0 0
    %1118 = vmatprep.mubr.bf16.mxu0 0
    %1119 = vmatmul.mubr.bf16.gmra.mrb[0].mxu0 %v1085
    %v1120 = vpop.f32.mrb[0].mxu0
    %v1121 = vadd.f32 0.0, %v1120
    %v1122 = vpop.f32.mrb[0].mxu0
    %v1123 = vadd.f32 0.0, %v1122
    %v1124 = vpop.f32.mrb[0].mxu0
    %v1125 = vpop.f32.mrb[0].mxu0
    %1126 = vdwg.mxu0
    %1127 = vmatprep.subr.bf16.mxu0 0
    %1128 = vmatpush1.bf16.msra.mxu0 %v490
    %1129 = vmatprep.subr.bf16.mxu0 0
    %1130 = vmatpush1.bf16.msra.mxu0 %v493
    %1131 = vmatprep.subr.bf16.mxu0 0
    %1132 = vmatpush1.bf16.msra.mxu0 %v496
    %1133 = vmatprep.subr.bf16.mxu0 0
    %1134 = vmatpush1.bf16.msra.mxu0 %v499
    %1135 = vmatprep.subr.bf16.mxu0 0
    %1136 = vmatpush1.bf16.msra.mxu0 %v502
    %1137 = vmatprep.subr.bf16.mxu0 0
    %1138 = vmatpush1.bf16.msra.mxu0 %v505
    %1139 = vmatprep.subr.bf16.mxu0 0
    %1140 = vmatpush1.bf16.msra.mxu0 %v508
    %1141 = vmatprep.subr.bf16.mxu0 0
    %1142 = vmatpush1.bf16.msra.mxu0 %v511
    %1143 = vmatprep.subr.bf16.mxu0 0
    %1144 = vmatpush1.bf16.msra.mxu0 0
    %1145 = vmatprep.subr.bf16.mxu0 0
    %1146 = vmatpush1.bf16.msra.mxu0 0
    %1147 = vmatprep.subr.bf16.mxu0 0
    %1148 = vmatpush1.bf16.msra.mxu0 0
    %1149 = vmatprep.subr.bf16.mxu0 0
    %1150 = vmatpush1.bf16.msra.mxu0 0
    %1151 = vmatprep.subr.bf16.mxu0 0
    %1152 = vmatpush1.bf16.msra.mxu0 0
    %1153 = vmatprep.subr.bf16.mxu0 0
    %1154 = vmatpush1.bf16.msra.mxu0 0
    %1155 = vmatprep.subr.bf16.mxu0 0
    %1156 = vmatpush1.bf16.msra.mxu0 0
    %1157 = vmatprep.subr.bf16.mxu0 0
    %1158 = vmatpush1.bf16.msra.mxu0 0
    %1159 = vmatprep.mubr.bf16.mxu0 0
    %1160 = vmatmul.mubr.bf16.gmra.mrb[0].mxu0 %v1085
    %v1161 = vpop.f32.mrb[0].mxu0
    %v1162 = vadd.f32 0.0, %v1161
    %v1163 = vpop.f32.mrb[0].mxu0
    %v1164 = vpop.f32.mrb[0].mxu0
    %v1165 = vpop.f32.mrb[0].mxu0
    %1166 = vdwg.mxu0
    %v1167 = vadd.f32 %v1082, %v1121
    %v1168 = vxor.u32 %v1167, 2147483648
    %v1169 = vmul.f32 %v1168, 1.442695
    %v1170 = vpow.pop %v1169
    %v1171 = vadd.f32 %v1170, 1.0
    %v1172 = vrcp.pop %v1171
    %v1173 = vmul.f32 1.0, %v1172
    %v1174 = vadd.f32 %v1083, %v1123
    %v1175 = vxor.u32 %v1174, 2147483648
    %v1176 = vmul.f32 %v1175, 1.442695
    %v1177 = vpow.pop %v1176
    %v1178 = vadd.f32 %v1177, 1.0
    %v1179 = vrcp.pop %v1178
    %v1180 = vmul.f32 1.0, %v1179
    %v1181 = vadd.f32 %v1162, %v368
    %v1182 = vmul.f32 %v1173, %v1181
    %v1183 = vadd.f32 %v1084, %v1182
    %v1184 = vtanh.pop %v1183
    %v1185 = vsub.f32 1.0, %v1180
    %v1186 = vmul.f32 %v1185, %v1184
    %v1187 = vmul.f32 %v1180, %v1078
    %v1188 = vadd.f32 %v1186, %v1187
    %s1189 = smul.u32 6, 3
    %s1190 = smul.addr %s1189, 8
    %s1191 = scalar_lea.vmem [#allocation2], %s1190
    %v1192 = vld [vmem:[%s1191] sm:$0xff]
    %v1193 = vld [vmem:[%s1191 + $0x8] sm:$0xff]
    %v1194 = vld [vmem:[%s1191 + $0x10] sm:$0xff]
    %v1195 = vpack.c.bf16 %v1188, %v1188
    %1196 = vmatprep.subr.bf16.mxu0 %v489
    %1197 = vmatpush1.bf16.msra.mxu0 %v488
    %1198 = vmatprep.subr.bf16.mxu0 %v492
    %1199 = vmatpush1.bf16.msra.mxu0 %v491
    %1200 = vmatprep.subr.bf16.mxu0 %v495
    %1201 = vmatpush1.bf16.msra.mxu0 %v494
    %1202 = vmatprep.subr.bf16.mxu0 %v498
    %1203 = vmatpush1.bf16.msra.mxu0 %v497
    %1204 = vmatprep.subr.bf16.mxu0 %v501
    %1205 = vmatpush1.bf16.msra.mxu0 %v500
    %1206 = vmatprep.subr.bf16.mxu0 %v504
    %1207 = vmatpush1.bf16.msra.mxu0 %v503
    %1208 = vmatprep.subr.bf16.mxu0 %v507
    %1209 = vmatpush1.bf16.msra.mxu0 %v506
    %1210 = vmatprep.subr.bf16.mxu0 %v510
    %1211 = vmatpush1.bf16.msra.mxu0 %v509
    %1212 = vmatprep.subr.bf16.mxu0 0
    %1213 = vmatpush1.bf16.msra.mxu0 0
    %1214 = vmatprep.subr.bf16.mxu0 0
    %1215 = vmatpush1.bf16.msra.mxu0 0
    %1216 = vmatprep.subr.bf16.mxu0 0
    %1217 = vmatpush1.bf16.msra.mxu0 0
    %1218 = vmatprep.subr.bf16.mxu0 0
    %1219 = vmatpush1.bf16.msra.mxu0 0
    %1220 = vmatprep.subr.bf16.mxu0 0
    %1221 = vmatpush1.bf16.msra.mxu0 0
    %1222 = vmatprep.subr.bf16.mxu0 0
    %1223 = vmatpush1.bf16.msra.mxu0 0
    %1224 = vmatprep.subr.bf16.mxu0 0
    %1225 = vmatpush1.bf16.msra.mxu0 0
    %1226 = vmatprep.subr.bf16.mxu0 0
    %1227 = vmatpush1.bf16.msra.mxu0 0
    %1228 = vmatprep.mubr.bf16.mxu0 0
    %1229 = vmatmul.mubr.bf16.gmra.mrb[0].mxu0 %v1195
    %v1230 = vpop.f32.mrb[0].mxu0
    %v1231 = vadd.f32 0.0, %v1230
    %v1232 = vpop.f32.mrb[0].mxu0
    %v1233 = vadd.f32 0.0, %v1232
    %v1234 = vpop.f32.mrb[0].mxu0
    %v1235 = vpop.f32.mrb[0].mxu0
    %1236 = vdwg.mxu0
    %1237 = vmatprep.subr.bf16.mxu0 0
    %1238 = vmatpush1.bf16.msra.mxu0 %v490
    %1239 = vmatprep.subr.bf16.mxu0 0
    %1240 = vmatpush1.bf16.msra.mxu0 %v493
    %1241 = vmatprep.subr.bf16.mxu0 0
    %1242 = vmatpush1.bf16.msra.mxu0 %v496
    %1243 = vmatprep.subr.bf16.mxu0 0
    %1244 = vmatpush1.bf16.msra.mxu0 %v499
    %1245 = vmatprep.subr.bf16.mxu0 0
    %1246 = vmatpush1.bf16.msra.mxu0 %v502
    %1247 = vmatprep.subr.bf16.mxu0 0
    %1248 = vmatpush1.bf16.msra.mxu0 %v505
    %1249 = vmatprep.subr.bf16.mxu0 0
    %1250 = vmatpush1.bf16.msra.mxu0 %v508
    %1251 = vmatprep.subr.bf16.mxu0 0
    %1252 = vmatpush1.bf16.msra.mxu0 %v511
    %1253 = vmatprep.subr.bf16.mxu0 0
    %1254 = vmatpush1.bf16.msra.mxu0 0
    %1255 = vmatprep.subr.bf16.mxu0 0
    %1256 = vmatpush1.bf16.msra.mxu0 0
    %1257 = vmatprep.subr.bf16.mxu0 0
    %1258 = vmatpush1.bf16.msra.mxu0 0
    %1259 = vmatprep.subr.bf16.mxu0 0
    %1260 = vmatpush1.bf16.msra.mxu0 0
    %1261 = vmatprep.subr.bf16.mxu0 0
    %1262 = vmatpush1.bf16.msra.mxu0 0
    %1263 = vmatprep.subr.bf16.mxu0 0
    %1264 = vmatpush1.bf16.msra.mxu0 0
    %1265 = vmatprep.subr.bf16.mxu0 0
    %1266 = vmatpush1.bf16.msra.mxu0 0
    %1267 = vmatprep.subr.bf16.mxu0 0
    %1268 = vmatpush1.bf16.msra.mxu0 0
    %1269 = vmatprep.mubr.bf16.mxu0 0
    %1270 = vmatmul.mubr.bf16.gmra.mrb[0].mxu0 %v1195
    %v1271 = vpop.f32.mrb[0].mxu0
    %v1272 = vadd.f32 0.0, %v1271
    %v1273 = vpop.f32.mrb[0].mxu0
    %v1274 = vpop.f32.mrb[0].mxu0
    %v1275 = vpop.f32.mrb[0].mxu0
    %1276 = vdwg.mxu0
    %v1277 = vadd.f32 %v1192, %v1231
    %v1278 = vxor.u32 %v1277, 2147483648
    %v1279 = vmul.f32 %v1278, 1.442695
    %v1280 = vpow.pop %v1279
    %v1281 = vadd.f32 %v1280, 1.0
    %v1282 = vrcp.pop %v1281
    %v1283 = vmul.f32 1.0, %v1282
    %v1284 = vadd.f32 %v1193, %v1233
    %v1285 = vxor.u32 %v1284, 2147483648
    %v1286 = vmul.f32 %v1285, 1.442695
    %v1287 = vpow.pop %v1286
    %v1288 = vadd.f32 %v1287, 1.0
    %v1289 = vrcp.pop %v1288
    %v1290 = vmul.f32 1.0, %v1289
    %v1291 = vadd.f32 %v1272, %v368
    %v1292 = vmul.f32 %v1283, %v1291
    %v1293 = vadd.f32 %v1194, %v1292
    %v1294 = vtanh.pop %v1293
    %v1295 = vsub.f32 1.0, %v1290
    %v1296 = vmul.f32 %v1295, %v1294
    %v1297 = vmul.f32 %v1290, %v1188
    %v1298 = vadd.f32 %v1296, %v1297
    %s1299 = smul.u32 7, 3
    %s1300 = smul.addr %s1299, 8
    %s1301 = scalar_lea.vmem [#allocation2], %s1300
    %v1302 = vld [vmem:[%s1301] sm:$0xff]
    %v1303 = vld [vmem:[%s1301 + $0x8] sm:$0xff]
    %v1304 = vld [vmem:[%s1301 + $0x10] sm:$0xff]
    %v1305 = vpack.c.bf16 %v1298, %v1298
    %1306 = vmatprep.subr.bf16.mxu0 %v489
    %1307 = vmatpush1.bf16.msra.mxu0 %v488
    %1308 = vmatprep.subr.bf16.mxu0 %v492
    %1309 = vmatpush1.bf16.msra.mxu0 %v491
    %1310 = vmatprep.subr.bf16.mxu0 %v495
    %1311 = vmatpush1.bf16.msra.mxu0 %v494
    %1312 = vmatprep.subr.bf16.mxu0 %v498
    %1313 = vmatpush1.bf16.msra.mxu0 %v497
    %1314 = vmatprep.subr.bf16.mxu0 %v501
    %1315 = vmatpush1.bf16.msra.mxu0 %v500
    %1316 = vmatprep.subr.bf16.mxu0 %v504
    %1317 = vmatpush1.bf16.msra.mxu0 %v503
    %1318 = vmatprep.subr.bf16.mxu0 %v507
    %1319 = vmatpush1.bf16.msra.mxu0 %v506
    %1320 = vmatprep.subr.bf16.mxu0 %v510
    %1321 = vmatpush1.bf16.msra.mxu0 %v509
    %1322 = vmatprep.subr.bf16.mxu0 0
    %1323 = vmatpush1.bf16.msra.mxu0 0
    %1324 = vmatprep.subr.bf16.mxu0 0
    %1325 = vmatpush1.bf16.msra.mxu0 0
    %1326 = vmatprep.subr.bf16.mxu0 0
    %1327 = vmatpush1.bf16.msra.mxu0 0
    %1328 = vmatprep.subr.bf16.mxu0 0
    %1329 = vmatpush1.bf16.msra.mxu0 0
    %1330 = vmatprep.subr.bf16.mxu0 0
    %1331 = vmatpush1.bf16.msra.mxu0 0
    %1332 = vmatprep.subr.bf16.mxu0 0
    %1333 = vmatpush1.bf16.msra.mxu0 0
    %1334 = vmatprep.subr.bf16.mxu0 0
    %1335 = vmatpush1.bf16.msra.mxu0 0
    %1336 = vmatprep.subr.bf16.mxu0 0
    %1337 = vmatpush1.bf16.msra.mxu0 0
    %1338 = vmatprep.mubr.bf16.mxu0 0
    %1339 = vmatmul.mubr.bf16.gmra.mrb[0].mxu0 %v1305
    %v1340 = vpop.f32.mrb[0].mxu0
    %v1341 = vadd.f32 0.0, %v1340
    %v1342 = vpop.f32.mrb[0].mxu0
    %v1343 = vadd.f32 0.0, %v1342
    %v1344 = vpop.f32.mrb[0].mxu0
    %v1345 = vpop.f32.mrb[0].mxu0
    %1346 = vdwg.mxu0
    %1347 = vmatprep.subr.bf16.mxu0 0
    %1348 = vmatpush1.bf16.msra.mxu0 %v490
    %1349 = vmatprep.subr.bf16.mxu0 0
    %1350 = vmatpush1.bf16.msra.mxu0 %v493
    %1351 = vmatprep.subr.bf16.mxu0 0
    %1352 = vmatpush1.bf16.msra.mxu0 %v496
    %1353 = vmatprep.subr.bf16.mxu0 0
    %1354 = vmatpush1.bf16.msra.mxu0 %v499
    %1355 = vmatprep.subr.bf16.mxu0 0
    %1356 = vmatpush1.bf16.msra.mxu0 %v502
    %1357 = vmatprep.subr.bf16.mxu0 0
    %1358 = vmatpush1.bf16.msra.mxu0 %v505
    %1359 = vmatprep.subr.bf16.mxu0 0
    %1360 = vmatpush1.bf16.msra.mxu0 %v508
    %1361 = vmatprep.subr.bf16.mxu0 0
    %1362 = vmatpush1.bf16.msra.mxu0 %v511
    %1363 = vmatprep.subr.bf16.mxu0 0
    %1364 = vmatpush1.bf16.msra.mxu0 0
    %1365 = vmatprep.subr.bf16.mxu0 0
    %1366 = vmatpush1.bf16.msra.mxu0 0
    %1367 = vmatprep.subr.bf16.mxu0 0
    %1368 = vmatpush1.bf16.msra.mxu0 0
    %1369 = vmatprep.subr.bf16.mxu0 0
    %1370 = vmatpush1.bf16.msra.mxu0 0
    %1371 = vmatprep.subr.bf16.mxu0 0
    %1372 = vmatpush1.bf16.msra.mxu0 0
    %1373 = vmatprep.subr.bf16.mxu0 0
    %1374 = vmatpush1.bf16.msra.mxu0 0
    %1375 = vmatprep.subr.bf16.mxu0 0
    %1376 = vmatpush1.bf16.msra.mxu0 0
    %1377 = vmatprep.subr.bf16.mxu0 0
    %1378 = vmatpush1.bf16.msra.mxu0 0
    %1379 = vmatprep.mubr.bf16.mxu0 0
    %1380 = vmatmul.mubr.bf16.gmra.mrb[0].mxu0 %v1305
    %v1381 = vpop.f32.mrb[0].mxu0
    %v1382 = vadd.f32 0.0, %v1381
    %v1383 = vpop.f32.mrb[0].mxu0
    %v1384 = vpop.f32.mrb[0].mxu0
    %v1385 = vpop.f32.mrb[0].mxu0
    %1386 = vdwg.mxu0
    %v1387 = vadd.f32 %v1302, %v1341
    %v1388 = vxor.u32 %v1387, 2147483648
    %v1389 = vmul.f32 %v1388, 1.442695
    %v1390 = vpow.pop %v1389
    %v1391 = vadd.f32 %v1390, 1.0
    %v1392 = vrcp.pop %v1391
    %v1393 = vmul.f32 1.0, %v1392
    %v1394 = vadd.f32 %v1303, %v1343
    %v1395 = vxor.u32 %v1394, 2147483648
    %v1396 = vmul.f32 %v1395, 1.442695
    %v1397 = vpow.pop %v1396
    %v1398 = vadd.f32 %v1397, 1.0
    %v1399 = vrcp.pop %v1398
    %v1400 = vmul.f32 1.0, %v1399
    %v1401 = vadd.f32 %v1382, %v368
    %v1402 = vmul.f32 %v1393, %v1401
    %v1403 = vadd.f32 %v1304, %v1402
    %v1404 = vtanh.pop %v1403
    %v1405 = vsub.f32 1.0, %v1400
    %v1406 = vmul.f32 %v1405, %v1404
    %v1407 = vmul.f32 %v1400, %v1298
    %v1408 = vadd.f32 %v1406, %v1407
    %1409 = vst [vmem:[#allocation9] sm:$0xff] %v1408
    // Predicated region
    $region34: #{tpu_custom_call.1} parent=1 // pred_check
      _
    $region35: #{tpu_custom_call.1} parent=1 // pred_check_branch
      %1411 = sbr.rel (0) target = $region37
    $region36: #{tpu_custom_call.1} parent=1 // pred_region
      %s1413 = ssub.s32 128, 128
      %1414 = vsyncadd [#allocation5], %s1413
      %s1416 = sshll.u32 [#allocation9], 4
      %s1417 = int_to_ptr.vmem [resolvable:$true] %s1416
      %1419 = dma.vmem_to_hbm [thread:$0]  %s1417, 128, %s5, [#allocation5]
    $region37: #{tpu_custom_call.1} parent=1 // pred_fallthru
      _
    // Predicated region
    $region38: #{tpu_custom_call.1} parent=1 // pred_check
      _
    $region39: #{tpu_custom_call.1} parent=1 // pred_check_branch
      %1421 = sbr.rel (0) target = $region41
    $region40: #{tpu_custom_call.1} parent=1 // pred_region
      %1422 = dma.done [#allocation5], 128
    $region41: #{tpu_custom_call.1} parent=1 // pred_fallthru
      _
    %1423 = vsyncpa [#allocation4], 1
    %1424 = vsyncpa [#allocation7], 1
    %1425 = vsyncpa [#allocation5], 1

</llo_original>
